<compile_context>
chip_gen: v5e
topology: v5e:2x2
jax: 0.10.0
libtpu: 0.0.40
codegen_flags: <defaults>
</compile_context>

<pallas_src>
import jax
import jax.numpy as jnp
from jax import lax
from jax.experimental import pallas as pl
from jax.experimental.pallas import tpu as pltpu


def lstm_kernel(x_ref, wih_ref, whh_ref, b_ref, wlin_ref, blin_ref,
                out_ref, xw_scr):
    """Full recurrence + final linear for one (padded) batch block.

    x_ref    : (T, Bb, I)     VMEM   Bb is a multiple of 8 (padded batch)
    wih_ref  : (I, 4*HP)      VMEM   gates [i, f, o, g], each padded H->HP,
                                     g-gate columns pre-scaled by 2
    whh_ref  : (HP, 4*HP)     VMEM   rows H..HP zero, same gate layout/scaling
    b_ref    : (1, 4*HP)      VMEM   (b_ih + b_hh), padded/reordered/scaled
    wlin_ref : (HP, O)        VMEM   rows H..HP zero
    blin_ref : (1, O)         VMEM
    out_ref  : (Bb, O)        VMEM
    xw_scr   : (T, Bb, 4*HP)  VMEM scratch: precomputed x@W_ih + b
    """
    T, Bb, I = x_ref.shape
    HP4 = whh_ref.shape[1]
    HP = HP4 // 4

    # ---- Input projection hoisted out of the recurrence (computed once). ----
    if I == 1:
        # Outer product: VPU broadcast-multiply, no MXU op needed.
        xw_scr[...] = x_ref[...] * wih_ref[...] + b_ref[...]
    else:
        x_flat = x_ref[...].reshape(T * Bb, I)
        xw_scr[...] = (jnp.dot(x_flat, wih_ref[...],
                               preferred_element_type=jnp.float32)
                       + b_ref[...]).reshape(T, Bb, HP4)

    # Zero init keeps the padded lanes H..HP inert: their gate pre-activations
    # are exactly 0 (zero weight columns / rows / bias), so g=0, c stays 0 and
    # h stays 0 there.  If nonzero initial (h_0, c_0) ever become inputs, their
    # padded lanes MUST be zeroed too.
    h0 = jnp.zeros((Bb, HP), jnp.float32)
    c0 = jnp.zeros((Bb, HP), jnp.float32)

    def step(t, carry):
        h, c = carry
        # One fused recurrent matmul per step (weights read from the VMEM ref,
        # not held live across the unrolled loop).
        pre = xw_scr[t] + jnp.dot(h, whh_ref[...],
                                  preferred_element_type=jnp.float32)
        # Single sigmoid over all 4*HP gate lanes.  The g-gate pre-activation
        # was pre-scaled by 2 at pack time, so tanh(z) == 2*sigmoid(2z) - 1 is
        # recovered with a free VPU fixup.  Gate layout: [i | f | o | g].
        s = jax.nn.sigmoid(pre)
        i_gate = s[:, :HP]
        f_gate = s[:, HP: 2 * HP]
        o_gate = s[:, 2 * HP: 3 * HP]
        g_gate = 2.0 * s[:, 3 * HP:] - 1.0
        c_new = f_gate * c + i_gate * g_gate
        h_new = o_gate * jnp.tanh(c_new)
        return h_new, c_new

    # State carried in registers; short fixed T -> fully unrolled.
    h_fin, _ = lax.fori_loop(0, T, step, (h0, c0), unroll=True)

    # predictions = linear(lstm_out[-1]) = h_T @ W_lin + b_lin
    out_ref[...] = (jnp.dot(h_fin, wlin_ref[...],
                            preferred_element_type=jnp.float32)
                    + blin_ref[...])


def _pack_params(w_ih, w_hh, bias, w_lin, H, HP):
    """Repack PyTorch-ordered [i,f,g,o] gate stacks into lane-concatenated,
    per-gate-padded matrices with gate order [i, f, o, g].

    The g gate's weights/bias are pre-scaled by 2 so a single sigmoid over all
    gates plus the fixup g = 2*sigmoid(pre_g) - 1 reproduces tanh exactly."""
    order = (0, 1, 3, 2)           # i, f, o, g  (g last -> contiguous fixup slice)
    scale = (1.0, 1.0, 1.0, 2.0)   # pre-scale g pre-activation by 2

    def pad_cols(w):  # (X, H) -> (X, HP), zero padding in lanes H..HP
        return jnp.pad(w, ((0, 0), (0, HP - H)))

    wih_cat = jnp.concatenate(
        [s * pad_cols(w_ih[k]) for k, s in zip(order, scale)], axis=1)   # (I, 4HP)
    whh_cat = jnp.concatenate(
        [s * pad_cols(w_hh[k]) for k, s in zip(order, scale)], axis=1)   # (H, 4HP)
    whh_cat = jnp.pad(whh_cat, ((0, HP - H), (0, 0)))                    # (HP, 4HP)
    b_cat = jnp.concatenate(
        [s * pad_cols(bias[k]) for k, s in zip(order, scale)], axis=1)   # (1, 4HP)
    wlin_pad = jnp.pad(w_lin, ((0, HP - H), (0, 0)))                     # (HP, O)
    return wih_cat, whh_cat, b_cat, wlin_pad


def lstm_forward(x, w_ih, w_hh, bias, w_lin, b_lin):
    T, B, I = x.shape
    H = w_hh.shape[-1]
    O = w_lin.shape[-1]
    HP = ((H + 127) // 128) * 128   # per-gate lane padding
    BP = ((B + 7) // 8) * 8         # fill the MXU M-dim / sublanes with batch

    if BP != B:
        # Padded batch rows evolve independently (row-wise matmuls) and are
        # sliced off after the call; they never contaminate real rows.
        x = jnp.pad(x, ((0, 0), (0, BP - B), (0, 0)))

    wih_cat, whh_cat, b_cat, wlin_pad = _pack_params(w_ih, w_hh, bias,
                                                     w_lin, H, HP)

    # Batch-block grid ("parallel"): independent recurrences per block.
    # Only split across the two v7x TensorCores when each block keeps >= 64
    # rows; for small B the whole (padded) batch stays on one core — splitting
    # a tiny batch duplicates the full serial recurrence for zero gain.
    if BP % 2 == 0 and (BP // 2) >= 64:
        b_block = BP // 2
    else:
        b_block = BP
    n_b = BP // b_block

    # Whole-sequence VMEM footprint (f32): x + xw scratch + packed weights + out.
    footprint = 4 * (T * b_block * I + T * b_block * 4 * HP + I * 4 * HP
                     + HP * 4 * HP + 4 * HP + HP * O + O + b_block * O)
    vmem_limit = None
    if 2 * footprint > (12 << 20):
        # Raise the scoped-VMEM limit before resorting to T-streaming
        # (defaults: 16 MiB on v5e, 32 MiB on v6e/v7x).  Cap at v7x's 64 MiB
        # physical VMEM; beyond that the T-streaming TODO applies.
        vmem_limit = min(2 * footprint + (4 << 20), 64 << 20)

    out_padded = pl.pallas_call(
        lstm_kernel,
        out_shape=jax.ShapeDtypeStruct((BP, O), jnp.float32),
        grid_spec=pltpu.PrefetchScalarGridSpec(
            num_scalar_prefetch=0,
            grid=(n_b,),
            in_specs=[
                pl.BlockSpec((T, b_block, I), lambda b: (0, b, 0)),
                pl.BlockSpec((I, 4 * HP), lambda b: (0, 0)),
                pl.BlockSpec((HP, 4 * HP), lambda b: (0, 0)),
                pl.BlockSpec((1, 4 * HP), lambda b: (0, 0)),
                pl.BlockSpec((HP, O), lambda b: (0, 0)),
                pl.BlockSpec((1, O), lambda b: (0, 0)),
            ],
            out_specs=pl.BlockSpec((b_block, O), lambda b: (b, 0)),
            scratch_shapes=[
                pltpu.VMEM((T, b_block, 4 * HP), jnp.float32),  # x@W_ih + b
            ],
        ),
        compiler_params=pltpu.CompilerParams(
            dimension_semantics=("parallel",),
            vmem_limit_bytes=vmem_limit),
    )(x, wih_cat, whh_cat, b_cat, wlin_pad, b_lin)

    return out_padded[:B]


def lstm_reference(x, w_ih, w_hh, bias, w_lin, b_lin):
    """Pure-JAX reference reproducing torch nn.LSTM + Linear semantics."""
    T, B, I = x.shape
    H = w_hh.shape[-1]
    h = jnp.zeros((B, H), jnp.float32)
    c = jnp.zeros((B, H), jnp.float32)
    for t in range(T):
        x_t = x[t]
        pre = [x_t @ w_ih[k] + h @ w_hh[k] + bias[k] for k in range(4)]
        i_g = jax.nn.sigmoid(pre[0])
        f_g = jax.nn.sigmoid(pre[1])
        g_g = jnp.tanh(pre[2])
        o_g = jax.nn.sigmoid(pre[3])
        c = f_g * c + i_g * g_g
        h = o_g * jnp.tanh(c)
    return h @ w_lin + b_lin


if __name__ == "__main__":
    # Module defaults: input_size=1, hidden_layer_size=50, output_size=1
    INPUT_SIZE = 1
    HIDDEN = 50
    OUTPUT = 1
    SEQ = 8
    BATCH = 4

    key = jax.random.PRNGKey(0)
    k_x, k_wih, k_whh, k_bih, k_bhh, k_wl, k_bl = jax.random.split(key, 7)

    bound = 1.0 / jnp.sqrt(HIDDEN)  # matches torch uniform(-1/sqrt(H), 1/sqrt(H))

    x = jax.random.normal(k_x, (SEQ, BATCH, INPUT_SIZE), jnp.float32)

    # Gate-stacked parameters, gate order [i, f, g, o] (PyTorch order).
    w_ih = jax.random.uniform(k_wih, (4, INPUT_SIZE, HIDDEN), jnp.float32,
                              -bound, bound)
    w_hh = jax.random.uniform(k_whh, (4, HIDDEN, HIDDEN), jnp.float32,
                              -bound, bound)
    b_ih = jax.random.uniform(k_bih, (4, 1, HIDDEN), jnp.float32, -bound, bound)
    b_hh = jax.random.uniform(k_bhh, (4, 1, HIDDEN), jnp.float32, -bound, bound)
    bias = b_ih + b_hh  # torch adds both biases; pre-sum them

    w_lin = jax.random.uniform(k_wl, (HIDDEN, OUTPUT), jnp.float32, -bound, bound)
    b_lin = jax.random.uniform(k_bl, (1, OUTPUT), jnp.float32, -bound, bound)

    out = lstm_forward(x, w_ih, w_hh, bias, w_lin, b_lin)
    out = jax.block_until_ready(out)

    ref = lstm_reference(x, w_ih, w_hh, bias, w_lin, b_lin)
    assert out.shape == (BATCH, OUTPUT)
    # Slightly looser than before: g gate now goes through sigmoid (tanh via
    # identity 2*sigmoid(2z)-1), which is mathematically exact but can differ
    # from the reference tanh by a few ulps per step.
    assert jnp.allclose(out, ref, atol=5e-5, rtol=5e-5), (out, ref)

    print("KERNEL_OK")
</pallas_src>

<mosaic_0001>
module attributes {stable_mosaic.version = 11 : i64} {
  func.func @lstm_kernel(%arg0: i32, %arg1: memref<8x8x1xf32, #tpu.memory_space<vmem>>, %arg2: memref<1x512xf32, #tpu.memory_space<vmem>>, %arg3: memref<128x512xf32, #tpu.memory_space<vmem>>, %arg4: memref<1x512xf32, #tpu.memory_space<vmem>>, %arg5: memref<128x1xf32, #tpu.memory_space<vmem>>, %arg6: memref<1x1xf32, #tpu.memory_space<vmem>>, %arg7: memref<8x1xf32, #tpu.memory_space<vmem>>, %arg8: memref<8x8x512xf32, #tpu.memory_space<vmem>>) attributes {dimension_semantics = [#tpu.dimension_semantics<parallel>], iteration_bounds = array<i64: 1>, scalar_prefetch = 0 : i64, scratch_operands = 1 : i64, tpu.core_type = #tpu.core_type<tc>, window_params = [{transform_indices = @transform_0, window_bounds = array<i64: 8, 8, 1>}, {pipeline_mode = #tpu.pipeline_mode<synchronous>, transform_indices = @transform_1, window_bounds = array<i64: 1, 512>}, {pipeline_mode = #tpu.pipeline_mode<synchronous>, transform_indices = @transform_2, window_bounds = array<i64: 128, 512>}, {pipeline_mode = #tpu.pipeline_mode<synchronous>, transform_indices = @transform_3, window_bounds = array<i64: 1, 512>}, {pipeline_mode = #tpu.pipeline_mode<synchronous>, transform_indices = @transform_4, window_bounds = array<i64: 128, 1>}, {pipeline_mode = #tpu.pipeline_mode<synchronous>, transform_indices = @transform_5, window_bounds = array<i64: 1, 1>}, {transform_indices = @transform_6, window_bounds = array<i64: 8, 1>}]} {
    %c0 = arith.constant 0 : index
    %c0_0 = arith.constant 0 : index
    %c0_1 = arith.constant 0 : index
    %0 = vector.load %arg1[%c0, %c0_0, %c0_1] : memref<8x8x1xf32, #tpu.memory_space<vmem>>, vector<8x8x1xf32>
    %c0_2 = arith.constant 0 : index
    %c0_3 = arith.constant 0 : index
    %1 = vector.load %arg2[%c0_2, %c0_3] : memref<1x512xf32, #tpu.memory_space<vmem>>, vector<1x512xf32>
    %2 = vector.shape_cast %1 : vector<1x512xf32> to vector<1x1x512xf32>
    %3 = vector.broadcast %0 : vector<8x8x1xf32> to vector<8x8x512xf32>
    %4 = vector.broadcast %2 : vector<1x1x512xf32> to vector<8x8x512xf32>
    %5 = arith.mulf %3, %4 : vector<8x8x512xf32>
    %c0_4 = arith.constant 0 : index
    %c0_5 = arith.constant 0 : index
    %6 = vector.load %arg4[%c0_4, %c0_5] : memref<1x512xf32, #tpu.memory_space<vmem>>, vector<1x512xf32>
    %7 = vector.shape_cast %6 : vector<1x512xf32> to vector<1x1x512xf32>
    %8 = vector.broadcast %7 : vector<1x1x512xf32> to vector<8x8x512xf32>
    %9 = arith.addf %5, %8 : vector<8x8x512xf32>
    %c0_6 = arith.constant 0 : index
    %c0_7 = arith.constant 0 : index
    %c0_8 = arith.constant 0 : index
    %10 = vector.load %arg8[%c0_6, %c0_7, %c0_8] : memref<8x8x512xf32, #tpu.memory_space<vmem>>, vector<8x8x512xf32>
    tpu.vector_store %arg8[%c0_6, %c0_7, %c0_8], %9 {strides = array<i32>} : memref<8x8x512xf32, #tpu.memory_space<vmem>>, vector<8x8x512xf32>,
    %cst = arith.constant 0.000000e+00 : f32
    %11 = vector.broadcast %cst : f32 to vector<8x128xf32>
    %cst_9 = arith.constant 0.000000e+00 : f32
    %12 = vector.broadcast %cst_9 : f32 to vector<8x128xf32>
    %c0_i32 = arith.constant 0 : i32
    %13 = arith.index_cast %c0_i32 : i32 to index
    %c0_10 = arith.constant 0 : index
    %c0_11 = arith.constant 0 : index
    %14 = vector.load %arg8[%13, %c0_10, %c0_11] : memref<8x8x512xf32, #tpu.memory_space<vmem>>, vector<1x8x512xf32>
    %15 = vector.shape_cast %14 : vector<1x8x512xf32> to vector<8x512xf32>
    %c0_12 = arith.constant 0 : index
    %c0_13 = arith.constant 0 : index
    %16 = vector.load %arg3[%c0_12, %c0_13] : memref<128x512xf32, #tpu.memory_space<vmem>>, vector<128x512xf32>
    %cst_14 = arith.constant dense<0.000000e+00> : vector<8x512xf32>
    %17 = tpu.matmul %11, %16, %cst_14 {dimension_numbers = #tpu.dot_dimension_numbers<[1], [0], [0], [1], [0, 0, 1, 1], [], []>} : vector<8x128xf32>, vector<128x512xf32>, vector<8x512xf32> -> vector<8x512xf32>
    %18 = arith.addf %15, %17 : vector<8x512xf32>
    %19 = arith.negf %18 : vector<8x512xf32>
    %20 = math.exp %19 : vector<8x512xf32>
    %cst_15 = arith.constant 1.000000e+00 : f32
    %21 = vector.broadcast %cst_15 : f32 to vector<8x512xf32>
    %22 = arith.addf %21, %20 : vector<8x512xf32>
    %23 = arith.divf %21, %22 : vector<8x512xf32>
    %24 = vector.extract_strided_slice %23 {offsets = [0, 0], sizes = [8, 128], strides = [1, 1]} : vector<8x512xf32> to vector<8x128xf32>
    %25 = vector.extract_strided_slice %23 {offsets = [0, 128], sizes = [8, 128], strides = [1, 1]} : vector<8x512xf32> to vector<8x128xf32>
    %26 = vector.extract_strided_slice %23 {offsets = [0, 256], sizes = [8, 128], strides = [1, 1]} : vector<8x512xf32> to vector<8x128xf32>
    %27 = vector.extract_strided_slice %23 {offsets = [0, 384], sizes = [8, 128], strides = [1, 1]} : vector<8x512xf32> to vector<8x128xf32>
    %cst_16 = arith.constant 2.000000e+00 : f32
    %28 = vector.broadcast %cst_16 : f32 to vector<8x128xf32>
    %29 = arith.mulf %28, %27 : vector<8x128xf32>
    %cst_17 = arith.constant 1.000000e+00 : f32
    %30 = vector.broadcast %cst_17 : f32 to vector<8x128xf32>
    %31 = arith.subf %29, %30 : vector<8x128xf32>
    %32 = arith.mulf %25, %12 : vector<8x128xf32>
    %33 = arith.mulf %24, %31 : vector<8x128xf32>
    %34 = arith.addf %32, %33 : vector<8x128xf32>
    %35 = math.tanh %34 : vector<8x128xf32>
    %36 = arith.mulf %26, %35 : vector<8x128xf32>
    %c1_i32 = arith.constant 1 : i32
    %37 = arith.index_cast %c1_i32 : i32 to index
    %c0_18 = arith.constant 0 : index
    %c0_19 = arith.constant 0 : index
    %38 = vector.load %arg8[%37, %c0_18, %c0_19] : memref<8x8x512xf32, #tpu.memory_space<vmem>>, vector<1x8x512xf32>
    %39 = vector.shape_cast %38 : vector<1x8x512xf32> to vector<8x512xf32>
    %c0_20 = arith.constant 0 : index
    %c0_21 = arith.constant 0 : index
    %40 = vector.load %arg3[%c0_20, %c0_21] : memref<128x512xf32, #tpu.memory_space<vmem>>, vector<128x512xf32>
    %cst_22 = arith.constant dense<0.000000e+00> : vector<8x512xf32>
    %41 = tpu.matmul %36, %40, %cst_22 {dimension_numbers = #tpu.dot_dimension_numbers<[1], [0], [0], [1], [0, 0, 1, 1], [], []>} : vector<8x128xf32>, vector<128x512xf32>, vector<8x512xf32> -> vector<8x512xf32>
    %42 = arith.addf %39, %41 : vector<8x512xf32>
    %43 = arith.negf %42 : vector<8x512xf32>
    %44 = math.exp %43 : vector<8x512xf32>
    %cst_23 = arith.constant 1.000000e+00 : f32
    %45 = vector.broadcast %cst_23 : f32 to vector<8x512xf32>
    %46 = arith.addf %45, %44 : vector<8x512xf32>
    %47 = arith.divf %45, %46 : vector<8x512xf32>
    %48 = vector.extract_strided_slice %47 {offsets = [0, 0], sizes = [8, 128], strides = [1, 1]} : vector<8x512xf32> to vector<8x128xf32>
    %49 = vector.extract_strided_slice %47 {offsets = [0, 128], sizes = [8, 128], strides = [1, 1]} : vector<8x512xf32> to vector<8x128xf32>
    %50 = vector.extract_strided_slice %47 {offsets = [0, 256], sizes = [8, 128], strides = [1, 1]} : vector<8x512xf32> to vector<8x128xf32>
    %51 = vector.extract_strided_slice %47 {offsets = [0, 384], sizes = [8, 128], strides = [1, 1]} : vector<8x512xf32> to vector<8x128xf32>
    %cst_24 = arith.constant 2.000000e+00 : f32
    %52 = vector.broadcast %cst_24 : f32 to vector<8x128xf32>
    %53 = arith.mulf %52, %51 : vector<8x128xf32>
    %cst_25 = arith.constant 1.000000e+00 : f32
    %54 = vector.broadcast %cst_25 : f32 to vector<8x128xf32>
    %55 = arith.subf %53, %54 : vector<8x128xf32>
    %56 = arith.mulf %49, %34 : vector<8x128xf32>
    %57 = arith.mulf %48, %55 : vector<8x128xf32>
    %58 = arith.addf %56, %57 : vector<8x128xf32>
    %59 = math.tanh %58 : vector<8x128xf32>
    %60 = arith.mulf %50, %59 : vector<8x128xf32>
    %c2_i32 = arith.constant 2 : i32
    %61 = arith.index_cast %c2_i32 : i32 to index
    %c0_26 = arith.constant 0 : index
    %c0_27 = arith.constant 0 : index
    %62 = vector.load %arg8[%61, %c0_26, %c0_27] : memref<8x8x512xf32, #tpu.memory_space<vmem>>, vector<1x8x512xf32>
    %63 = vector.shape_cast %62 : vector<1x8x512xf32> to vector<8x512xf32>
    %c0_28 = arith.constant 0 : index
    %c0_29 = arith.constant 0 : index
    %64 = vector.load %arg3[%c0_28, %c0_29] : memref<128x512xf32, #tpu.memory_space<vmem>>, vector<128x512xf32>
    %cst_30 = arith.constant dense<0.000000e+00> : vector<8x512xf32>
    %65 = tpu.matmul %60, %64, %cst_30 {dimension_numbers = #tpu.dot_dimension_numbers<[1], [0], [0], [1], [0, 0, 1, 1], [], []>} : vector<8x128xf32>, vector<128x512xf32>, vector<8x512xf32> -> vector<8x512xf32>
    %66 = arith.addf %63, %65 : vector<8x512xf32>
    %67 = arith.negf %66 : vector<8x512xf32>
    %68 = math.exp %67 : vector<8x512xf32>
    %cst_31 = arith.constant 1.000000e+00 : f32
    %69 = vector.broadcast %cst_31 : f32 to vector<8x512xf32>
    %70 = arith.addf %69, %68 : vector<8x512xf32>
    %71 = arith.divf %69, %70 : vector<8x512xf32>
    %72 = vector.extract_strided_slice %71 {offsets = [0, 0], sizes = [8, 128], strides = [1, 1]} : vector<8x512xf32> to vector<8x128xf32>
    %73 = vector.extract_strided_slice %71 {offsets = [0, 128], sizes = [8, 128], strides = [1, 1]} : vector<8x512xf32> to vector<8x128xf32>
    %74 = vector.extract_strided_slice %71 {offsets = [0, 256], sizes = [8, 128], strides = [1, 1]} : vector<8x512xf32> to vector<8x128xf32>
    %75 = vector.extract_strided_slice %71 {offsets = [0, 384], sizes = [8, 128], strides = [1, 1]} : vector<8x512xf32> to vector<8x128xf32>
    %cst_32 = arith.constant 2.000000e+00 : f32
    %76 = vector.broadcast %cst_32 : f32 to vector<8x128xf32>
    %77 = arith.mulf %76, %75 : vector<8x128xf32>
    %cst_33 = arith.constant 1.000000e+00 : f32
    %78 = vector.broadcast %cst_33 : f32 to vector<8x128xf32>
    %79 = arith.subf %77, %78 : vector<8x128xf32>
    %80 = arith.mulf %73, %58 : vector<8x128xf32>
    %81 = arith.mulf %72, %79 : vector<8x128xf32>
    %82 = arith.addf %80, %81 : vector<8x128xf32>
    %83 = math.tanh %82 : vector<8x128xf32>
    %84 = arith.mulf %74, %83 : vector<8x128xf32>
    %c3_i32 = arith.constant 3 : i32
    %85 = arith.index_cast %c3_i32 : i32 to index
    %c0_34 = arith.constant 0 : index
    %c0_35 = arith.constant 0 : index
    %86 = vector.load %arg8[%85, %c0_34, %c0_35] : memref<8x8x512xf32, #tpu.memory_space<vmem>>, vector<1x8x512xf32>
    %87 = vector.shape_cast %86 : vector<1x8x512xf32> to vector<8x512xf32>
    %c0_36 = arith.constant 0 : index
    %c0_37 = arith.constant 0 : index
    %88 = vector.load %arg3[%c0_36, %c0_37] : memref<128x512xf32, #tpu.memory_space<vmem>>, vector<128x512xf32>
    %cst_38 = arith.constant dense<0.000000e+00> : vector<8x512xf32>
    %89 = tpu.matmul %84, %88, %cst_38 {dimension_numbers = #tpu.dot_dimension_numbers<[1], [0], [0], [1], [0, 0, 1, 1], [], []>} : vector<8x128xf32>, vector<128x512xf32>, vector<8x512xf32> -> vector<8x512xf32>
    %90 = arith.addf %87, %89 : vector<8x512xf32>
    %91 = arith.negf %90 : vector<8x512xf32>
    %92 = math.exp %91 : vector<8x512xf32>
    %cst_39 = arith.constant 1.000000e+00 : f32
    %93 = vector.broadcast %cst_39 : f32 to vector<8x512xf32>
    %94 = arith.addf %93, %92 : vector<8x512xf32>
    %95 = arith.divf %93, %94 : vector<8x512xf32>
    %96 = vector.extract_strided_slice %95 {offsets = [0, 0], sizes = [8, 128], strides = [1, 1]} : vector<8x512xf32> to vector<8x128xf32>
    %97 = vector.extract_strided_slice %95 {offsets = [0, 128], sizes = [8, 128], strides = [1, 1]} : vector<8x512xf32> to vector<8x128xf32>
    %98 = vector.extract_strided_slice %95 {offsets = [0, 256], sizes = [8, 128], strides = [1, 1]} : vector<8x512xf32> to vector<8x128xf32>
    %99 = vector.extract_strided_slice %95 {offsets = [0, 384], sizes = [8, 128], strides = [1, 1]} : vector<8x512xf32> to vector<8x128xf32>
    %cst_40 = arith.constant 2.000000e+00 : f32
    %100 = vector.broadcast %cst_40 : f32 to vector<8x128xf32>
    %101 = arith.mulf %100, %99 : vector<8x128xf32>
    %cst_41 = arith.constant 1.000000e+00 : f32
    %102 = vector.broadcast %cst_41 : f32 to vector<8x128xf32>
    %103 = arith.subf %101, %102 : vector<8x128xf32>
    %104 = arith.mulf %97, %82 : vector<8x128xf32>
    %105 = arith.mulf %96, %103 : vector<8x128xf32>
    %106 = arith.addf %104, %105 : vector<8x128xf32>
    %107 = math.tanh %106 : vector<8x128xf32>
    %108 = arith.mulf %98, %107 : vector<8x128xf32>
    %c4_i32 = arith.constant 4 : i32
    %109 = arith.index_cast %c4_i32 : i32 to index
    %c0_42 = arith.constant 0 : index
    %c0_43 = arith.constant 0 : index
    %110 = vector.load %arg8[%109, %c0_42, %c0_43] : memref<8x8x512xf32, #tpu.memory_space<vmem>>, vector<1x8x512xf32>
    %111 = vector.shape_cast %110 : vector<1x8x512xf32> to vector<8x512xf32>
    %c0_44 = arith.constant 0 : index
    %c0_45 = arith.constant 0 : index
    %112 = vector.load %arg3[%c0_44, %c0_45] : memref<128x512xf32, #tpu.memory_space<vmem>>, vector<128x512xf32>
    %cst_46 = arith.constant dense<0.000000e+00> : vector<8x512xf32>
    %113 = tpu.matmul %108, %112, %cst_46 {dimension_numbers = #tpu.dot_dimension_numbers<[1], [0], [0], [1], [0, 0, 1, 1], [], []>} : vector<8x128xf32>, vector<128x512xf32>, vector<8x512xf32> -> vector<8x512xf32>
    %114 = arith.addf %111, %113 : vector<8x512xf32>
    %115 = arith.negf %114 : vector<8x512xf32>
    %116 = math.exp %115 : vector<8x512xf32>
    %cst_47 = arith.constant 1.000000e+00 : f32
    %117 = vector.broadcast %cst_47 : f32 to vector<8x512xf32>
    %118 = arith.addf %117, %116 : vector<8x512xf32>
    %119 = arith.divf %117, %118 : vector<8x512xf32>
    %120 = vector.extract_strided_slice %119 {offsets = [0, 0], sizes = [8, 128], strides = [1, 1]} : vector<8x512xf32> to vector<8x128xf32>
    %121 = vector.extract_strided_slice %119 {offsets = [0, 128], sizes = [8, 128], strides = [1, 1]} : vector<8x512xf32> to vector<8x128xf32>
    %122 = vector.extract_strided_slice %119 {offsets = [0, 256], sizes = [8, 128], strides = [1, 1]} : vector<8x512xf32> to vector<8x128xf32>
    %123 = vector.extract_strided_slice %119 {offsets = [0, 384], sizes = [8, 128], strides = [1, 1]} : vector<8x512xf32> to vector<8x128xf32>
    %cst_48 = arith.constant 2.000000e+00 : f32
    %124 = vector.broadcast %cst_48 : f32 to vector<8x128xf32>
    %125 = arith.mulf %124, %123 : vector<8x128xf32>
    %cst_49 = arith.constant 1.000000e+00 : f32
    %126 = vector.broadcast %cst_49 : f32 to vector<8x128xf32>
    %127 = arith.subf %125, %126 : vector<8x128xf32>
    %128 = arith.mulf %121, %106 : vector<8x128xf32>
    %129 = arith.mulf %120, %127 : vector<8x128xf32>
    %130 = arith.addf %128, %129 : vector<8x128xf32>
    %131 = math.tanh %130 : vector<8x128xf32>
    %132 = arith.mulf %122, %131 : vector<8x128xf32>
    %c5_i32 = arith.constant 5 : i32
    %133 = arith.index_cast %c5_i32 : i32 to index
    %c0_50 = arith.constant 0 : index
    %c0_51 = arith.constant 0 : index
    %134 = vector.load %arg8[%133, %c0_50, %c0_51] : memref<8x8x512xf32, #tpu.memory_space<vmem>>, vector<1x8x512xf32>
    %135 = vector.shape_cast %134 : vector<1x8x512xf32> to vector<8x512xf32>
    %c0_52 = arith.constant 0 : index
    %c0_53 = arith.constant 0 : index
    %136 = vector.load %arg3[%c0_52, %c0_53] : memref<128x512xf32, #tpu.memory_space<vmem>>, vector<128x512xf32>
    %cst_54 = arith.constant dense<0.000000e+00> : vector<8x512xf32>
    %137 = tpu.matmul %132, %136, %cst_54 {dimension_numbers = #tpu.dot_dimension_numbers<[1], [0], [0], [1], [0, 0, 1, 1], [], []>} : vector<8x128xf32>, vector<128x512xf32>, vector<8x512xf32> -> vector<8x512xf32>
    %138 = arith.addf %135, %137 : vector<8x512xf32>
    %139 = arith.negf %138 : vector<8x512xf32>
    %140 = math.exp %139 : vector<8x512xf32>
    %cst_55 = arith.constant 1.000000e+00 : f32
    %141 = vector.broadcast %cst_55 : f32 to vector<8x512xf32>
    %142 = arith.addf %141, %140 : vector<8x512xf32>
    %143 = arith.divf %141, %142 : vector<8x512xf32>
    %144 = vector.extract_strided_slice %143 {offsets = [0, 0], sizes = [8, 128], strides = [1, 1]} : vector<8x512xf32> to vector<8x128xf32>
    %145 = vector.extract_strided_slice %143 {offsets = [0, 128], sizes = [8, 128], strides = [1, 1]} : vector<8x512xf32> to vector<8x128xf32>
    %146 = vector.extract_strided_slice %143 {offsets = [0, 256], sizes = [8, 128], strides = [1, 1]} : vector<8x512xf32> to vector<8x128xf32>
    %147 = vector.extract_strided_slice %143 {offsets = [0, 384], sizes = [8, 128], strides = [1, 1]} : vector<8x512xf32> to vector<8x128xf32>
    %cst_56 = arith.constant 2.000000e+00 : f32
    %148 = vector.broadcast %cst_56 : f32 to vector<8x128xf32>
    %149 = arith.mulf %148, %147 : vector<8x128xf32>
    %cst_57 = arith.constant 1.000000e+00 : f32
    %150 = vector.broadcast %cst_57 : f32 to vector<8x128xf32>
    %151 = arith.subf %149, %150 : vector<8x128xf32>
    %152 = arith.mulf %145, %130 : vector<8x128xf32>
    %153 = arith.mulf %144, %151 : vector<8x128xf32>
    %154 = arith.addf %152, %153 : vector<8x128xf32>
    %155 = math.tanh %154 : vector<8x128xf32>
    %156 = arith.mulf %146, %155 : vector<8x128xf32>
    %c6_i32 = arith.constant 6 : i32
    %157 = arith.index_cast %c6_i32 : i32 to index
    %c0_58 = arith.constant 0 : index
    %c0_59 = arith.constant 0 : index
    %158 = vector.load %arg8[%157, %c0_58, %c0_59] : memref<8x8x512xf32, #tpu.memory_space<vmem>>, vector<1x8x512xf32>
    %159 = vector.shape_cast %158 : vector<1x8x512xf32> to vector<8x512xf32>
    %c0_60 = arith.constant 0 : index
    %c0_61 = arith.constant 0 : index
    %160 = vector.load %arg3[%c0_60, %c0_61] : memref<128x512xf32, #tpu.memory_space<vmem>>, vector<128x512xf32>
    %cst_62 = arith.constant dense<0.000000e+00> : vector<8x512xf32>
    %161 = tpu.matmul %156, %160, %cst_62 {dimension_numbers = #tpu.dot_dimension_numbers<[1], [0], [0], [1], [0, 0, 1, 1], [], []>} : vector<8x128xf32>, vector<128x512xf32>, vector<8x512xf32> -> vector<8x512xf32>
    %162 = arith.addf %159, %161 : vector<8x512xf32>
    %163 = arith.negf %162 : vector<8x512xf32>
    %164 = math.exp %163 : vector<8x512xf32>
    %cst_63 = arith.constant 1.000000e+00 : f32
    %165 = vector.broadcast %cst_63 : f32 to vector<8x512xf32>
    %166 = arith.addf %165, %164 : vector<8x512xf32>
    %167 = arith.divf %165, %166 : vector<8x512xf32>
    %168 = vector.extract_strided_slice %167 {offsets = [0, 0], sizes = [8, 128], strides = [1, 1]} : vector<8x512xf32> to vector<8x128xf32>
    %169 = vector.extract_strided_slice %167 {offsets = [0, 128], sizes = [8, 128], strides = [1, 1]} : vector<8x512xf32> to vector<8x128xf32>
    %170 = vector.extract_strided_slice %167 {offsets = [0, 256], sizes = [8, 128], strides = [1, 1]} : vector<8x512xf32> to vector<8x128xf32>
    %171 = vector.extract_strided_slice %167 {offsets = [0, 384], sizes = [8, 128], strides = [1, 1]} : vector<8x512xf32> to vector<8x128xf32>
    %cst_64 = arith.constant 2.000000e+00 : f32
    %172 = vector.broadcast %cst_64 : f32 to vector<8x128xf32>
    %173 = arith.mulf %172, %171 : vector<8x128xf32>
    %cst_65 = arith.constant 1.000000e+00 : f32
    %174 = vector.broadcast %cst_65 : f32 to vector<8x128xf32>
    %175 = arith.subf %173, %174 : vector<8x128xf32>
    %176 = arith.mulf %169, %154 : vector<8x128xf32>
    %177 = arith.mulf %168, %175 : vector<8x128xf32>
    %178 = arith.addf %176, %177 : vector<8x128xf32>
    %179 = math.tanh %178 : vector<8x128xf32>
    %180 = arith.mulf %170, %179 : vector<8x128xf32>
    %c7_i32 = arith.constant 7 : i32
    %181 = arith.index_cast %c7_i32 : i32 to index
    %c0_66 = arith.constant 0 : index
    %c0_67 = arith.constant 0 : index
    %182 = vector.load %arg8[%181, %c0_66, %c0_67] : memref<8x8x512xf32, #tpu.memory_space<vmem>>, vector<1x8x512xf32>
    %183 = vector.shape_cast %182 : vector<1x8x512xf32> to vector<8x512xf32>
    %c0_68 = arith.constant 0 : index
    %c0_69 = arith.constant 0 : index
    %184 = vector.load %arg3[%c0_68, %c0_69] : memref<128x512xf32, #tpu.memory_space<vmem>>, vector<128x512xf32>
    %cst_70 = arith.constant dense<0.000000e+00> : vector<8x512xf32>
    %185 = tpu.matmul %180, %184, %cst_70 {dimension_numbers = #tpu.dot_dimension_numbers<[1], [0], [0], [1], [0, 0, 1, 1], [], []>} : vector<8x128xf32>, vector<128x512xf32>, vector<8x512xf32> -> vector<8x512xf32>
    %186 = arith.addf %183, %185 : vector<8x512xf32>
    %187 = arith.negf %186 : vector<8x512xf32>
    %188 = math.exp %187 : vector<8x512xf32>
    %cst_71 = arith.constant 1.000000e+00 : f32
    %189 = vector.broadcast %cst_71 : f32 to vector<8x512xf32>
    %190 = arith.addf %189, %188 : vector<8x512xf32>
    %191 = arith.divf %189, %190 : vector<8x512xf32>
    %192 = vector.extract_strided_slice %191 {offsets = [0, 0], sizes = [8, 128], strides = [1, 1]} : vector<8x512xf32> to vector<8x128xf32>
    %193 = vector.extract_strided_slice %191 {offsets = [0, 128], sizes = [8, 128], strides = [1, 1]} : vector<8x512xf32> to vector<8x128xf32>
    %194 = vector.extract_strided_slice %191 {offsets = [0, 256], sizes = [8, 128], strides = [1, 1]} : vector<8x512xf32> to vector<8x128xf32>
    %195 = vector.extract_strided_slice %191 {offsets = [0, 384], sizes = [8, 128], strides = [1, 1]} : vector<8x512xf32> to vector<8x128xf32>
    %cst_72 = arith.constant 2.000000e+00 : f32
    %196 = vector.broadcast %cst_72 : f32 to vector<8x128xf32>
    %197 = arith.mulf %196, %195 : vector<8x128xf32>
    %cst_73 = arith.constant 1.000000e+00 : f32
    %198 = vector.broadcast %cst_73 : f32 to vector<8x128xf32>
    %199 = arith.subf %197, %198 : vector<8x128xf32>
    %200 = arith.mulf %193, %178 : vector<8x128xf32>
    %201 = arith.mulf %192, %199 : vector<8x128xf32>
    %202 = arith.addf %200, %201 : vector<8x128xf32>
    %203 = math.tanh %202 : vector<8x128xf32>
    %204 = arith.mulf %194, %203 : vector<8x128xf32>
    %c8_i32 = arith.constant 8 : i32
    %c0_74 = arith.constant 0 : index
    %c0_75 = arith.constant 0 : index
    %205 = vector.load %arg5[%c0_74, %c0_75] : memref<128x1xf32, #tpu.memory_space<vmem>>, vector<128x1xf32>
    %cst_76 = arith.constant dense<0.000000e+00> : vector<8x1xf32>
    %206 = tpu.matmul %204, %205, %cst_76 {dimension_numbers = #tpu.dot_dimension_numbers<[1], [0], [0], [1], [0, 0, 1, 1], [], []>} : vector<8x128xf32>, vector<128x1xf32>, vector<8x1xf32> -> vector<8x1xf32>
    %c0_77 = arith.constant 0 : index
    %c0_78 = arith.constant 0 : index
    %207 = vector.load %arg6[%c0_77, %c0_78] : memref<1x1xf32, #tpu.memory_space<vmem>>, vector<1x1xf32>
    %208 = vector.broadcast %207 : vector<1x1xf32> to vector<8x1xf32>
    %209 = arith.addf %206, %208 : vector<8x1xf32>
    %c0_79 = arith.constant 0 : index
    %c0_80 = arith.constant 0 : index
    %210 = vector.load %arg7[%c0_79, %c0_80] : memref<8x1xf32, #tpu.memory_space<vmem>>, vector<8x1xf32>
    tpu.vector_store %arg7[%c0_79, %c0_80], %209 {strides = array<i32>} : memref<8x1xf32, #tpu.memory_space<vmem>>, vector<8x1xf32>,
    return
  }
  func.func @transform_0(%arg0: i32) -> (i32, i32, i32) {
    %c0_i32 = arith.constant 0 : i32
    %c0_i32_0 = arith.constant 0 : i32
    %c0_i32_1 = arith.constant 0 : i32
    return %c0_i32, %arg0, %c0_i32_0 : i32, i32, i32
  }
  func.func @transform_1(%arg0: i32) -> (i32, i32) {
    %c0_i32 = arith.constant 0 : i32
    %c0_i32_0 = arith.constant 0 : i32
    %c0_i32_1 = arith.constant 0 : i32
    return %c0_i32, %c0_i32_0 : i32, i32
  }
  func.func @transform_2(%arg0: i32) -> (i32, i32) {
    %c0_i32 = arith.constant 0 : i32
    %c0_i32_0 = arith.constant 0 : i32
    %c0_i32_1 = arith.constant 0 : i32
    return %c0_i32, %c0_i32_0 : i32, i32
  }
  func.func @transform_3(%arg0: i32) -> (i32, i32) {
    %c0_i32 = arith.constant 0 : i32
    %c0_i32_0 = arith.constant 0 : i32
    %c0_i32_1 = arith.constant 0 : i32
    return %c0_i32, %c0_i32_0 : i32, i32
  }
  func.func @transform_4(%arg0: i32) -> (i32, i32) {
    %c0_i32 = arith.constant 0 : i32
    %c0_i32_0 = arith.constant 0 : i32
    %c0_i32_1 = arith.constant 0 : i32
    return %c0_i32, %c0_i32_0 : i32, i32
  }
  func.func @transform_5(%arg0: i32) -> (i32, i32) {
    %c0_i32 = arith.constant 0 : i32
    %c0_i32_0 = arith.constant 0 : i32
    %c0_i32_1 = arith.constant 0 : i32
    return %c0_i32, %c0_i32_0 : i32, i32
  }
  func.func @transform_6(%arg0: i32) -> (i32, i32) {
    %c0_i32 = arith.constant 0 : i32
    %c0_i32_0 = arith.constant 0 : i32
    return %arg0, %c0_i32 : i32, i32
  }
}

</mosaic_0001>

<llo_original>
// kernel: tpu_custom_call.1
$region0: #{tpu_custom_call.1}
  #allocation0 [shape = 'u32[]', space=smem, size = 0x4, offset = 0x4, fixed_abs, tag = 'smem constant byte address 0x4 - core index']
  #allocation1 [shape = 'u32[72,128]{1,0:T(1,128)}', space=vmem, size = 0x9000, scoped, tag = 'internal scratch']
  #allocation2 [shape = 'f32[8,8,512]{2,1,0:T(8,128)}', space=vmem, size = 0x20000, scoped, tag = 'scratch operand']
  #allocation3 [shape = 'f32[1,1]{1,0:T(1,128)S(1)}', space=vmem, size = 0x200, scoped, tag = 'scoped memory for tpu_custom_call.1']
  %s0 = inlined_call_operand.vmem [shape: f32[8,8,1], index: 0, kind: input, shape index: {}]
  %s1 = inlined_call_operand.vmem [shape: f32[1,512], index: 1, kind: input, shape index: {}]
  %s2 = inlined_call_operand.hbm [shape: f32[128,512], index: 2, kind: input, shape index: {}]
  %s3 = inlined_call_operand.vmem [shape: f32[1,512], index: 3, kind: input, shape index: {}]
  %s4 = inlined_call_operand.vmem [shape: f32[128,1], index: 4, kind: input, shape index: {}]
  %s5 = inlined_call_operand.<no memory space> [shape: f32[1,1], index: 5, kind: input, shape index: {}]
  %s6 = inlined_call_operand.vmem [shape: f32[8,1], index: 6, kind: output, shape index: {}]
  %s7 = sld [smem:[#allocation0]]
  $region38: #{tpu_custom_call.1} parent=0
    _
  %s9 = ssub.s32 1, %s7
  %s10 = scalar_select 0, %s9, %s7
  %v11 = vstv %s5
  %12 = vst [vmem:[#allocation3] sm:$0x1] %v11
  $region1: #{tpu_custom_call.1} parent=0
    #allocation4 [shape = 'u8[262144]{0}', space=vmem, size = 0x40000, scoped, tag = 'input window, operand 2, single buffered']
    #allocation5 [shape = 's32[1]{0}', space=sflag, size = 0x4, scoped, tag = 'scoped memory for tpu_custom_call.1']
    %13 = vsyncpa [#allocation5], 0
    // Predicated region
    $region2: #{tpu_custom_call.1} parent=1 // pred_check
      _
    $region3: #{tpu_custom_call.1} parent=1 // pred_check_branch
      %15 = sbr.rel (0) target = $region5
    $region4: #{tpu_custom_call.1} parent=1 // pred_region
      _
    $region5: #{tpu_custom_call.1} parent=1 // pred_fallthru
      _
    // Predicated region
    $region6: #{tpu_custom_call.1} parent=1 // pred_check
      _
    $region7: #{tpu_custom_call.1} parent=1 // pred_check_branch
      %17 = sbr.rel (0) target = $region9
    $region8: #{tpu_custom_call.1} parent=1 // pred_region
      _
    $region9: #{tpu_custom_call.1} parent=1 // pred_fallthru
      _
    // Predicated region
    $region10: #{tpu_custom_call.1} parent=1 // pred_check
      _
    $region11: #{tpu_custom_call.1} parent=1 // pred_check_branch
      %19 = sbr.rel (0) target = $region13
    $region12: #{tpu_custom_call.1} parent=1 // pred_region
      %21 = vsyncadd [#allocation5], 0
      %s22 = sshll.u32 %s2, 4
      %s23 = int_to_ptr.hbm [resolvable:$true] %s22
      %s24 = sshll.u32 [#allocation4], 4
      %s25 = int_to_ptr.vmem [resolvable:$true] %s24
      %30 = dma.hbm_to_vmem [thread:$0]  %s23, 8192, %s25, [#allocation5], 512, 512, 32
    $region13: #{tpu_custom_call.1} parent=1 // pred_fallthru
      _
    // Predicated region
    $region14: #{tpu_custom_call.1} parent=1 // pred_check
      _
    $region15: #{tpu_custom_call.1} parent=1 // pred_check_branch
      %32 = sbr.rel (0) target = $region17
    $region16: #{tpu_custom_call.1} parent=1 // pred_region
      _
    $region17: #{tpu_custom_call.1} parent=1 // pred_fallthru
      _
    // Predicated region
    $region18: #{tpu_custom_call.1} parent=1 // pred_check
      _
    $region19: #{tpu_custom_call.1} parent=1 // pred_check_branch
      %34 = sbr.rel (0) target = $region21
    $region20: #{tpu_custom_call.1} parent=1 // pred_region
      _
    $region21: #{tpu_custom_call.1} parent=1 // pred_fallthru
      _
    // Predicated region
    $region22: #{tpu_custom_call.1} parent=1 // pred_check
      _
    $region23: #{tpu_custom_call.1} parent=1 // pred_check_branch
      %36 = sbr.rel (0) target = $region25
    $region24: #{tpu_custom_call.1} parent=1 // pred_region
      _
    $region25: #{tpu_custom_call.1} parent=1 // pred_fallthru
      _
    // Predicated region
    $region26: #{tpu_custom_call.1} parent=1 // pred_check
      _
    $region27: #{tpu_custom_call.1} parent=1 // pred_check_branch
      %38 = sbr.rel (0) target = $region29
    $region28: #{tpu_custom_call.1} parent=1 // pred_region
      %40 = dma.done [#allocation5], 8192
    $region29: #{tpu_custom_call.1} parent=1 // pred_fallthru
      _
    %v41 = vld [vmem:[%s0] sm:$0xff]
    %v42 = vld [vmem:[%s0 + $0x8] sm:$0xff]
    %v43 = vld [vmem:[%s0 + $0x10] sm:$0xff]
    %v44 = vld [vmem:[%s0 + $0x18] sm:$0xff]
    %v45 = vld [vmem:[%s0 + $0x20] sm:$0xff]
    %v46 = vld [vmem:[%s0 + $0x28] sm:$0xff]
    %v47 = vld [vmem:[%s0 + $0x30] sm:$0xff]
    %v48 = vld [vmem:[%s0 + $0x38] sm:$0xff]
    %v49 = vld [vmem:[%s1] sm:$0xf]
    %51 = vset.pattern.permute.xlu0 0
    %52 = vperm.xlu0 %51, %v41
    %v53 = vpop.permute.xlu0 %52
    %56 = vset.pattern.permute.xlu0 0
    %57 = vperm.xlu0 %56, %v42
    %v58 = vpop.permute.xlu0 %57
    %61 = vset.pattern.permute.xlu0 0
    %62 = vperm.xlu0 %61, %v43
    %v63 = vpop.permute.xlu0 %62
    %66 = vset.pattern.permute.xlu0 0
    %67 = vperm.xlu0 %66, %v44
    %v68 = vpop.permute.xlu0 %67
    %71 = vset.pattern.permute.xlu0 0
    %72 = vperm.xlu0 %71, %v45
    %v73 = vpop.permute.xlu0 %72
    %76 = vset.pattern.permute.xlu0 0
    %77 = vperm.xlu0 %76, %v46
    %v78 = vpop.permute.xlu0 %77
    %81 = vset.pattern.permute.xlu0 0
    %82 = vperm.xlu0 %81, %v47
    %v83 = vpop.permute.xlu0 %82
    %86 = vset.pattern.permute.xlu0 0
    %87 = vperm.xlu0 %86, %v48
    %v88 = vpop.permute.xlu0 %87
    %v91 = vperm.slane %v49, 0
    %v92 = vperm.slane %v49, 1
    %v93 = vperm.slane %v49, 2
    %v94 = vperm.slane %v49, 3
    %v99 = vmul.f32 %v53, %v91
    %v100 = vmul.f32 %v53, %v92
    %v101 = vmul.f32 %v53, %v93
    %v102 = vmul.f32 %v53, %v94
    %v103 = vmul.f32 %v58, %v91
    %v104 = vmul.f32 %v58, %v92
    %v105 = vmul.f32 %v58, %v93
    %v106 = vmul.f32 %v58, %v94
    %v107 = vmul.f32 %v63, %v91
    %v108 = vmul.f32 %v63, %v92
    %v109 = vmul.f32 %v63, %v93
    %v110 = vmul.f32 %v63, %v94
    %v111 = vmul.f32 %v68, %v91
    %v112 = vmul.f32 %v68, %v92
    %v113 = vmul.f32 %v68, %v93
    %v114 = vmul.f32 %v68, %v94
    %v115 = vmul.f32 %v73, %v91
    %v116 = vmul.f32 %v73, %v92
    %v117 = vmul.f32 %v73, %v93
    %v118 = vmul.f32 %v73, %v94
    %v119 = vmul.f32 %v78, %v91
    %v120 = vmul.f32 %v78, %v92
    %v121 = vmul.f32 %v78, %v93
    %v122 = vmul.f32 %v78, %v94
    %v123 = vmul.f32 %v83, %v91
    %v124 = vmul.f32 %v83, %v92
    %v125 = vmul.f32 %v83, %v93
    %v126 = vmul.f32 %v83, %v94
    %v127 = vmul.f32 %v88, %v91
    %v128 = vmul.f32 %v88, %v92
    %v129 = vmul.f32 %v88, %v93
    %v130 = vmul.f32 %v88, %v94
    %v131 = vld [vmem:[%s3] sm:$0xf]
    %v133 = vperm.slane %v131, 0
    %v134 = vperm.slane %v131, 1
    %v135 = vperm.slane %v131, 2
    %v136 = vperm.slane %v131, 3
    %v141 = vadd.f32 %v99, %v133
    %v142 = vadd.f32 %v100, %v134
    %v143 = vadd.f32 %v101, %v135
    %v144 = vadd.f32 %v102, %v136
    %v145 = vadd.f32 %v103, %v133
    %v146 = vadd.f32 %v104, %v134
    %v147 = vadd.f32 %v105, %v135
    %v148 = vadd.f32 %v106, %v136
    %v149 = vadd.f32 %v107, %v133
    %v150 = vadd.f32 %v108, %v134
    %v151 = vadd.f32 %v109, %v135
    %v152 = vadd.f32 %v110, %v136
    %v153 = vadd.f32 %v111, %v133
    %v154 = vadd.f32 %v112, %v134
    %v155 = vadd.f32 %v113, %v135
    %v156 = vadd.f32 %v114, %v136
    %v157 = vadd.f32 %v115, %v133
    %v158 = vadd.f32 %v116, %v134
    %v159 = vadd.f32 %v117, %v135
    %v160 = vadd.f32 %v118, %v136
    %v161 = vadd.f32 %v119, %v133
    %v162 = vadd.f32 %v120, %v134
    %v163 = vadd.f32 %v121, %v135
    %v164 = vadd.f32 %v122, %v136
    %v165 = vadd.f32 %v123, %v133
    %v166 = vadd.f32 %v124, %v134
    %v167 = vadd.f32 %v125, %v135
    %v168 = vadd.f32 %v126, %v136
    %v169 = vadd.f32 %v127, %v133
    %v170 = vadd.f32 %v128, %v134
    %v171 = vadd.f32 %v129, %v135
    %v172 = vadd.f32 %v130, %v136
    %173 = vst [vmem:[#allocation2] sm:$0xff] %v141
    %174 = vst [vmem:[#allocation2 + $0x8] sm:$0xff] %v142
    %175 = vst [vmem:[#allocation2 + $0x10] sm:$0xff] %v143
    %176 = vst [vmem:[#allocation2 + $0x18] sm:$0xff] %v144
    %177 = vst [vmem:[#allocation2 + $0x20] sm:$0xff] %v145
    %178 = vst [vmem:[#allocation2 + $0x28] sm:$0xff] %v146
    %179 = vst [vmem:[#allocation2 + $0x30] sm:$0xff] %v147
    %180 = vst [vmem:[#allocation2 + $0x38] sm:$0xff] %v148
    %181 = vst [vmem:[#allocation2 + $0x40] sm:$0xff] %v149
    %182 = vst [vmem:[#allocation2 + $0x48] sm:$0xff] %v150
    %183 = vst [vmem:[#allocation2 + $0x50] sm:$0xff] %v151
    %184 = vst [vmem:[#allocation2 + $0x58] sm:$0xff] %v152
    %185 = vst [vmem:[#allocation2 + $0x60] sm:$0xff] %v153
    %186 = vst [vmem:[#allocation2 + $0x68] sm:$0xff] %v154
    %187 = vst [vmem:[#allocation2 + $0x70] sm:$0xff] %v155
    %188 = vst [vmem:[#allocation2 + $0x78] sm:$0xff] %v156
    %189 = vst [vmem:[#allocation2 + $0x80] sm:$0xff] %v157
    %190 = vst [vmem:[#allocation2 + $0x88] sm:$0xff] %v158
    %191 = vst [vmem:[#allocation2 + $0x90] sm:$0xff] %v159
    %192 = vst [vmem:[#allocation2 + $0x98] sm:$0xff] %v160
    %193 = vst [vmem:[#allocation2 + $0xa0] sm:$0xff] %v161
    %194 = vst [vmem:[#allocation2 + $0xa8] sm:$0xff] %v162
    %195 = vst [vmem:[#allocation2 + $0xb0] sm:$0xff] %v163
    %196 = vst [vmem:[#allocation2 + $0xb8] sm:$0xff] %v164
    %197 = vst [vmem:[#allocation2 + $0xc0] sm:$0xff] %v165
    %198 = vst [vmem:[#allocation2 + $0xc8] sm:$0xff] %v166
    %199 = vst [vmem:[#allocation2 + $0xd0] sm:$0xff] %v167
    %200 = vst [vmem:[#allocation2 + $0xd8] sm:$0xff] %v168
    %201 = vst [vmem:[#allocation2 + $0xe0] sm:$0xff] %v169
    %202 = vst [vmem:[#allocation2 + $0xe8] sm:$0xff] %v170
    %203 = vst [vmem:[#allocation2 + $0xf0] sm:$0xff] %v171
    %204 = vst [vmem:[#allocation2 + $0xf8] sm:$0xff] %v172
    %v205 = vld [vmem:[#allocation2] sm:$0xff]
    %v206 = vld [vmem:[#allocation2 + $0x8] sm:$0xff]
    %v207 = vld [vmem:[#allocation2 + $0x10] sm:$0xff]
    %v208 = vld [vmem:[#allocation2 + $0x18] sm:$0xff]
    %v209 = vld [vmem:[#allocation4] sm:$0xff]
    %v210 = vld [vmem:[#allocation4 + $0x8] sm:$0xff]
    %v211 = vld [vmem:[#allocation4 + $0x10] sm:$0xff]
    %v212 = vld [vmem:[#allocation4 + $0x18] sm:$0xff]
    %v213 = vld [vmem:[#allocation4 + $0x20] sm:$0xff]
    %v214 = vld [vmem:[#allocation4 + $0x28] sm:$0xff]
    %v215 = vld [vmem:[#allocation4 + $0x30] sm:$0xff]
    %v216 = vld [vmem:[#allocation4 + $0x38] sm:$0xff]
    %v217 = vld [vmem:[#allocation4 + $0x40] sm:$0xff]
    %v218 = vld [vmem:[#allocation4 + $0x48] sm:$0xff]
    %v219 = vld [vmem:[#allocation4 + $0x50] sm:$0xff]
    %v220 = vld [vmem:[#allocation4 + $0x58] sm:$0xff]
    %v221 = vld [vmem:[#allocation4 + $0x60] sm:$0xff]
    %v222 = vld [vmem:[#allocation4 + $0x68] sm:$0xff]
    %v223 = vld [vmem:[#allocation4 + $0x70] sm:$0xff]
    %v224 = vld [vmem:[#allocation4 + $0x78] sm:$0xff]
    %v225 = vld [vmem:[#allocation4 + $0x80] sm:$0xff]
    %v226 = vld [vmem:[#allocation4 + $0x88] sm:$0xff]
    %v227 = vld [vmem:[#allocation4 + $0x90] sm:$0xff]
    %v228 = vld [vmem:[#allocation4 + $0x98] sm:$0xff]
    %v229 = vld [vmem:[#allocation4 + $0xa0] sm:$0xff]
    %v230 = vld [vmem:[#allocation4 + $0xa8] sm:$0xff]
    %v231 = vld [vmem:[#allocation4 + $0xb0] sm:$0xff]
    %v232 = vld [vmem:[#allocation4 + $0xb8] sm:$0xff]
    %v233 = vld [vmem:[#allocation4 + $0xc0] sm:$0xff]
    %v234 = vld [vmem:[#allocation4 + $0xc8] sm:$0xff]
    %v235 = vld [vmem:[#allocation4 + $0xd0] sm:$0xff]
    %v236 = vld [vmem:[#allocation4 + $0xd8] sm:$0xff]
    %v237 = vld [vmem:[#allocation4 + $0xe0] sm:$0xff]
    %v238 = vld [vmem:[#allocation4 + $0xe8] sm:$0xff]
    %v239 = vld [vmem:[#allocation4 + $0xf0] sm:$0xff]
    %v240 = vld [vmem:[#allocation4 + $0xf8] sm:$0xff]
    %v241 = vld [vmem:[#allocation4 + $0x100] sm:$0xff]
    %v242 = vld [vmem:[#allocation4 + $0x108] sm:$0xff]
    %v243 = vld [vmem:[#allocation4 + $0x110] sm:$0xff]
    %v244 = vld [vmem:[#allocation4 + $0x118] sm:$0xff]
    %v245 = vld [vmem:[#allocation4 + $0x120] sm:$0xff]
    %v246 = vld [vmem:[#allocation4 + $0x128] sm:$0xff]
    %v247 = vld [vmem:[#allocation4 + $0x130] sm:$0xff]
    %v248 = vld [vmem:[#allocation4 + $0x138] sm:$0xff]
    %v249 = vld [vmem:[#allocation4 + $0x140] sm:$0xff]
    %v250 = vld [vmem:[#allocation4 + $0x148] sm:$0xff]
    %v251 = vld [vmem:[#allocation4 + $0x150] sm:$0xff]
    %v252 = vld [vmem:[#allocation4 + $0x158] sm:$0xff]
    %v253 = vld [vmem:[#allocation4 + $0x160] sm:$0xff]
    %v254 = vld [vmem:[#allocation4 + $0x168] sm:$0xff]
    %v255 = vld [vmem:[#allocation4 + $0x170] sm:$0xff]
    %v256 = vld [vmem:[#allocation4 + $0x178] sm:$0xff]
    %v257 = vld [vmem:[#allocation4 + $0x180] sm:$0xff]
    %v258 = vld [vmem:[#allocation4 + $0x188] sm:$0xff]
    %v259 = vld [vmem:[#allocation4 + $0x190] sm:$0xff]
    %v260 = vld [vmem:[#allocation4 + $0x198] sm:$0xff]
    %v261 = vld [vmem:[#allocation4 + $0x1a0] sm:$0xff]
    %v262 = vld [vmem:[#allocation4 + $0x1a8] sm:$0xff]
    %v263 = vld [vmem:[#allocation4 + $0x1b0] sm:$0xff]
    %v264 = vld [vmem:[#allocation4 + $0x1b8] sm:$0xff]
    %v265 = vld [vmem:[#allocation4 + $0x1c0] sm:$0xff]
    %v266 = vld [vmem:[#allocation4 + $0x1c8] sm:$0xff]
    %v267 = vld [vmem:[#allocation4 + $0x1d0] sm:$0xff]
    %v268 = vld [vmem:[#allocation4 + $0x1d8] sm:$0xff]
    %v269 = vld [vmem:[#allocation4 + $0x1e0] sm:$0xff]
    %v270 = vld [vmem:[#allocation4 + $0x1e8] sm:$0xff]
    %v271 = vld [vmem:[#allocation4 + $0x1f0] sm:$0xff]
    %v272 = vld [vmem:[#allocation4 + $0x1f8] sm:$0xff]
    %273 = vmatpush.msra.mxu0 %v269
    %274 = vmatpush.msra.mxu0 %v265
    %275 = vmatpush.msra.mxu0 %v261
    %276 = vmatpush.msra.mxu0 %v257
    %277 = vmatpush.msra.mxu0 %v253
    %278 = vmatpush.msra.mxu0 %v249
    %279 = vmatpush.msra.mxu0 %v245
    %280 = vmatpush.msra.mxu0 %v241
    %281 = vmatpush.msra.mxu0 %v237
    %282 = vmatpush.msra.mxu0 %v233
    %283 = vmatpush.msra.mxu0 %v229
    %284 = vmatpush.msra.mxu0 %v225
    %285 = vmatpush.msra.mxu0 %v221
    %286 = vmatpush.msra.mxu0 %v217
    %287 = vmatpush.msra.mxu0 %v213
    %288 = vmatpush.msra.mxu0 %v209
    %289 = vmatmul.f32.gmra.mxu0 0.0
    %v290 = vpop.f32.mrf.mxu0
    %v291 = vadd.f32 0.0, %v290
    %292 = vdwg.mxu0
    %293 = vmatpush.msra.mxu0 %v270
    %294 = vmatpush.msra.mxu0 %v266
    %295 = vmatpush.msra.mxu0 %v262
    %296 = vmatpush.msra.mxu0 %v258
    %297 = vmatpush.msra.mxu0 %v254
    %298 = vmatpush.msra.mxu0 %v250
    %299 = vmatpush.msra.mxu0 %v246
    %300 = vmatpush.msra.mxu0 %v242
    %301 = vmatpush.msra.mxu0 %v238
    %302 = vmatpush.msra.mxu0 %v234
    %303 = vmatpush.msra.mxu0 %v230
    %304 = vmatpush.msra.mxu0 %v226
    %305 = vmatpush.msra.mxu0 %v222
    %306 = vmatpush.msra.mxu0 %v218
    %307 = vmatpush.msra.mxu0 %v214
    %308 = vmatpush.msra.mxu0 %v210
    %309 = vmatmul.f32.gmra.mxu0 0.0
    %v310 = vpop.f32.mrf.mxu0
    %v311 = vadd.f32 0.0, %v310
    %312 = vdwg.mxu0
    %313 = vmatpush.msra.mxu0 %v271
    %314 = vmatpush.msra.mxu0 %v267
    %315 = vmatpush.msra.mxu0 %v263
    %316 = vmatpush.msra.mxu0 %v259
    %317 = vmatpush.msra.mxu0 %v255
    %318 = vmatpush.msra.mxu0 %v251
    %319 = vmatpush.msra.mxu0 %v247
    %320 = vmatpush.msra.mxu0 %v243
    %321 = vmatpush.msra.mxu0 %v239
    %322 = vmatpush.msra.mxu0 %v235
    %323 = vmatpush.msra.mxu0 %v231
    %324 = vmatpush.msra.mxu0 %v227
    %325 = vmatpush.msra.mxu0 %v223
    %326 = vmatpush.msra.mxu0 %v219
    %327 = vmatpush.msra.mxu0 %v215
    %328 = vmatpush.msra.mxu0 %v211
    %329 = vmatmul.f32.gmra.mxu0 0.0
    %v330 = vpop.f32.mrf.mxu0
    %v331 = vadd.f32 0.0, %v330
    %332 = vdwg.mxu0
    %333 = vmatpush.msra.mxu0 %v272
    %334 = vmatpush.msra.mxu0 %v268
    %335 = vmatpush.msra.mxu0 %v264
    %336 = vmatpush.msra.mxu0 %v260
    %337 = vmatpush.msra.mxu0 %v256
    %338 = vmatpush.msra.mxu0 %v252
    %339 = vmatpush.msra.mxu0 %v248
    %340 = vmatpush.msra.mxu0 %v244
    %341 = vmatpush.msra.mxu0 %v240
    %342 = vmatpush.msra.mxu0 %v236
    %343 = vmatpush.msra.mxu0 %v232
    %344 = vmatpush.msra.mxu0 %v228
    %345 = vmatpush.msra.mxu0 %v224
    %346 = vmatpush.msra.mxu0 %v220
    %347 = vmatpush.msra.mxu0 %v216
    %348 = vmatpush.msra.mxu0 %v212
    %349 = vmatmul.f32.gmra.mxu0 0.0
    %v350 = vpop.f32.mrf.mxu0
    %v351 = vadd.f32 0.0, %v350
    %352 = vdwg.mxu0
    %v353 = vadd.f32 %v205, %v291
    %v354 = vadd.f32 %v206, %v311
    %v355 = vadd.f32 %v207, %v331
    %v356 = vadd.f32 %v208, %v351
    %v357 = vxor.u32 %v353, 2147483648
    %v358 = vxor.u32 %v354, 2147483648
    %v359 = vxor.u32 %v355, 2147483648
    %v360 = vxor.u32 %v356, 2147483648
    %v361 = vmul.f32 %v357, 1.442695
    %v362 = vpow.pop %v361
    %v363 = vmul.f32 %v358, 1.442695
    %v364 = vpow.pop %v363
    %v365 = vmul.f32 %v359, 1.442695
    %v366 = vpow.pop %v365
    %v367 = vmul.f32 %v360, 1.442695
    %v368 = vpow.pop %v367
    %v369 = vadd.f32 %v362, 1.0
    %v370 = vadd.f32 %v364, 1.0
    %v371 = vadd.f32 %v366, 1.0
    %v372 = vadd.f32 %v368, 1.0
    %v373 = vrcp.pop %v369
    %v374 = vmul.f32 %v369, %v373
    %v375 = vsub.f32 1.0, %v374
    %v376 = vmul.f32 %v373, %v375
    %v377 = vadd.f32 %v373, %v376
    %vm378 = vweird.f32 %v369
    %vm379 = vweird.f32 %v373
    %vm380 = vmor %vm378, %vm379
    %v381 = vsel %vm380, %v373, %v377
    %v382 = vand.u32 2147483647, %v369
    %vm383 = vcmp.eq.f32.partialorder %v382, 8.507059e+37
    %v384 = vand.u32 %v369, 2147483648
    %v385 = vor.u32 1.1754944e-38, %v384
    %v386 = vsel %vm383, %v385, %v381
    %v387 = vmul.f32 1.0, %v386
    %v388 = vrcp.pop %v370
    %v389 = vmul.f32 %v370, %v388
    %v390 = vsub.f32 1.0, %v389
    %v391 = vmul.f32 %v388, %v390
    %v392 = vadd.f32 %v388, %v391
    %vm393 = vweird.f32 %v370
    %vm394 = vweird.f32 %v388
    %vm395 = vmor %vm393, %vm394
    %v396 = vsel %vm395, %v388, %v392
    %v397 = vand.u32 2147483647, %v370
    %vm398 = vcmp.eq.f32.partialorder %v397, 8.507059e+37
    %v399 = vand.u32 %v370, 2147483648
    %v400 = vor.u32 1.1754944e-38, %v399
    %v401 = vsel %vm398, %v400, %v396
    %v402 = vmul.f32 1.0, %v401
    %v403 = vrcp.pop %v371
    %v404 = vmul.f32 %v371, %v403
    %v405 = vsub.f32 1.0, %v404
    %v406 = vmul.f32 %v403, %v405
    %v407 = vadd.f32 %v403, %v406
    %vm408 = vweird.f32 %v371
    %vm409 = vweird.f32 %v403
    %vm410 = vmor %vm408, %vm409
    %v411 = vsel %vm410, %v403, %v407
    %v412 = vand.u32 2147483647, %v371
    %vm413 = vcmp.eq.f32.partialorder %v412, 8.507059e+37
    %v414 = vand.u32 %v371, 2147483648
    %v415 = vor.u32 1.1754944e-38, %v414
    %v416 = vsel %vm413, %v415, %v411
    %v417 = vmul.f32 1.0, %v416
    %v418 = vrcp.pop %v372
    %v419 = vmul.f32 %v372, %v418
    %v420 = vsub.f32 1.0, %v419
    %v421 = vmul.f32 %v418, %v420
    %v422 = vadd.f32 %v418, %v421
    %vm423 = vweird.f32 %v372
    %vm424 = vweird.f32 %v418
    %vm425 = vmor %vm423, %vm424
    %v426 = vsel %vm425, %v418, %v422
    %v427 = vand.u32 2147483647, %v372
    %vm428 = vcmp.eq.f32.partialorder %v427, 8.507059e+37
    %v429 = vand.u32 %v372, 2147483648
    %v430 = vor.u32 1.1754944e-38, %v429
    %v431 = vsel %vm428, %v430, %v426
    %v432 = vmul.f32 1.0, %v431
    %v433 = vmul.f32 %v432, 2.0
    %v434 = vsub.f32 %v433, 1.0
    %v435 = vmul.f32 %v402, 0.0
    %v436 = vmul.f32 %v387, %v434
    %v437 = vadd.f32 %v435, %v436
    %v438 = vtanh.pop %v437
    %v439 = vmul.f32 %v417, %v438
    %s440 = scalar_lea.vmem [#allocation2], 32
    %v441 = vld [vmem:[%s440] sm:$0xff]
    %v442 = vld [vmem:[%s440 + $0x8] sm:$0xff]
    %v443 = vld [vmem:[%s440 + $0x10] sm:$0xff]
    %v444 = vld [vmem:[%s440 + $0x18] sm:$0xff]
    %445 = vmatpush.msra.mxu0 %v269
    %446 = vmatpush.msra.mxu0 %v265
    %447 = vmatpush.msra.mxu0 %v261
    %448 = vmatpush.msra.mxu0 %v257
    %449 = vmatpush.msra.mxu0 %v253
    %450 = vmatpush.msra.mxu0 %v249
    %451 = vmatpush.msra.mxu0 %v245
    %452 = vmatpush.msra.mxu0 %v241
    %453 = vmatpush.msra.mxu0 %v237
    %454 = vmatpush.msra.mxu0 %v233
    %455 = vmatpush.msra.mxu0 %v229
    %456 = vmatpush.msra.mxu0 %v225
    %457 = vmatpush.msra.mxu0 %v221
    %458 = vmatpush.msra.mxu0 %v217
    %459 = vmatpush.msra.mxu0 %v213
    %460 = vmatpush.msra.mxu0 %v209
    %461 = vmatmul.f32.gmra.mxu0 %v439
    %v462 = vpop.f32.mrf.mxu0
    %v463 = vadd.f32 0.0, %v462
    %464 = vdwg.mxu0
    %465 = vmatpush.msra.mxu0 %v270
    %466 = vmatpush.msra.mxu0 %v266
    %467 = vmatpush.msra.mxu0 %v262
    %468 = vmatpush.msra.mxu0 %v258
    %469 = vmatpush.msra.mxu0 %v254
    %470 = vmatpush.msra.mxu0 %v250
    %471 = vmatpush.msra.mxu0 %v246
    %472 = vmatpush.msra.mxu0 %v242
    %473 = vmatpush.msra.mxu0 %v238
    %474 = vmatpush.msra.mxu0 %v234
    %475 = vmatpush.msra.mxu0 %v230
    %476 = vmatpush.msra.mxu0 %v226
    %477 = vmatpush.msra.mxu0 %v222
    %478 = vmatpush.msra.mxu0 %v218
    %479 = vmatpush.msra.mxu0 %v214
    %480 = vmatpush.msra.mxu0 %v210
    %481 = vmatmul.f32.gmra.mxu0 %v439
    %v482 = vpop.f32.mrf.mxu0
    %v483 = vadd.f32 0.0, %v482
    %484 = vdwg.mxu0
    %485 = vmatpush.msra.mxu0 %v271
    %486 = vmatpush.msra.mxu0 %v267
    %487 = vmatpush.msra.mxu0 %v263
    %488 = vmatpush.msra.mxu0 %v259
    %489 = vmatpush.msra.mxu0 %v255
    %490 = vmatpush.msra.mxu0 %v251
    %491 = vmatpush.msra.mxu0 %v247
    %492 = vmatpush.msra.mxu0 %v243
    %493 = vmatpush.msra.mxu0 %v239
    %494 = vmatpush.msra.mxu0 %v235
    %495 = vmatpush.msra.mxu0 %v231
    %496 = vmatpush.msra.mxu0 %v227
    %497 = vmatpush.msra.mxu0 %v223
    %498 = vmatpush.msra.mxu0 %v219
    %499 = vmatpush.msra.mxu0 %v215
    %500 = vmatpush.msra.mxu0 %v211
    %501 = vmatmul.f32.gmra.mxu0 %v439
    %v502 = vpop.f32.mrf.mxu0
    %v503 = vadd.f32 0.0, %v502
    %504 = vdwg.mxu0
    %505 = vmatpush.msra.mxu0 %v272
    %506 = vmatpush.msra.mxu0 %v268
    %507 = vmatpush.msra.mxu0 %v264
    %508 = vmatpush.msra.mxu0 %v260
    %509 = vmatpush.msra.mxu0 %v256
    %510 = vmatpush.msra.mxu0 %v252
    %511 = vmatpush.msra.mxu0 %v248
    %512 = vmatpush.msra.mxu0 %v244
    %513 = vmatpush.msra.mxu0 %v240
    %514 = vmatpush.msra.mxu0 %v236
    %515 = vmatpush.msra.mxu0 %v232
    %516 = vmatpush.msra.mxu0 %v228
    %517 = vmatpush.msra.mxu0 %v224
    %518 = vmatpush.msra.mxu0 %v220
    %519 = vmatpush.msra.mxu0 %v216
    %520 = vmatpush.msra.mxu0 %v212
    %521 = vmatmul.f32.gmra.mxu0 %v439
    %v522 = vpop.f32.mrf.mxu0
    %v523 = vadd.f32 0.0, %v522
    %524 = vdwg.mxu0
    %v525 = vadd.f32 %v441, %v463
    %v526 = vadd.f32 %v442, %v483
    %v527 = vadd.f32 %v443, %v503
    %v528 = vadd.f32 %v444, %v523
    %v529 = vxor.u32 %v525, 2147483648
    %v530 = vxor.u32 %v526, 2147483648
    %v531 = vxor.u32 %v527, 2147483648
    %v532 = vxor.u32 %v528, 2147483648
    %v533 = vmul.f32 %v529, 1.442695
    %v534 = vpow.pop %v533
    %v535 = vmul.f32 %v530, 1.442695
    %v536 = vpow.pop %v535
    %v537 = vmul.f32 %v531, 1.442695
    %v538 = vpow.pop %v537
    %v539 = vmul.f32 %v532, 1.442695
    %v540 = vpow.pop %v539
    %v541 = vadd.f32 %v534, 1.0
    %v542 = vadd.f32 %v536, 1.0
    %v543 = vadd.f32 %v538, 1.0
    %v544 = vadd.f32 %v540, 1.0
    %v545 = vrcp.pop %v541
    %v546 = vmul.f32 %v541, %v545
    %v547 = vsub.f32 1.0, %v546
    %v548 = vmul.f32 %v545, %v547
    %v549 = vadd.f32 %v545, %v548
    %vm550 = vweird.f32 %v541
    %vm551 = vweird.f32 %v545
    %vm552 = vmor %vm550, %vm551
    %v553 = vsel %vm552, %v545, %v549
    %v554 = vand.u32 2147483647, %v541
    %vm555 = vcmp.eq.f32.partialorder %v554, 8.507059e+37
    %v556 = vand.u32 %v541, 2147483648
    %v557 = vor.u32 1.1754944e-38, %v556
    %v558 = vsel %vm555, %v557, %v553
    %v559 = vmul.f32 1.0, %v558
    %v560 = vrcp.pop %v542
    %v561 = vmul.f32 %v542, %v560
    %v562 = vsub.f32 1.0, %v561
    %v563 = vmul.f32 %v560, %v562
    %v564 = vadd.f32 %v560, %v563
    %vm565 = vweird.f32 %v542
    %vm566 = vweird.f32 %v560
    %vm567 = vmor %vm565, %vm566
    %v568 = vsel %vm567, %v560, %v564
    %v569 = vand.u32 2147483647, %v542
    %vm570 = vcmp.eq.f32.partialorder %v569, 8.507059e+37
    %v571 = vand.u32 %v542, 2147483648
    %v572 = vor.u32 1.1754944e-38, %v571
    %v573 = vsel %vm570, %v572, %v568
    %v574 = vmul.f32 1.0, %v573
    %v575 = vrcp.pop %v543
    %v576 = vmul.f32 %v543, %v575
    %v577 = vsub.f32 1.0, %v576
    %v578 = vmul.f32 %v575, %v577
    %v579 = vadd.f32 %v575, %v578
    %vm580 = vweird.f32 %v543
    %vm581 = vweird.f32 %v575
    %vm582 = vmor %vm580, %vm581
    %v583 = vsel %vm582, %v575, %v579
    %v584 = vand.u32 2147483647, %v543
    %vm585 = vcmp.eq.f32.partialorder %v584, 8.507059e+37
    %v586 = vand.u32 %v543, 2147483648
    %v587 = vor.u32 1.1754944e-38, %v586
    %v588 = vsel %vm585, %v587, %v583
    %v589 = vmul.f32 1.0, %v588
    %v590 = vrcp.pop %v544
    %v591 = vmul.f32 %v544, %v590
    %v592 = vsub.f32 1.0, %v591
    %v593 = vmul.f32 %v590, %v592
    %v594 = vadd.f32 %v590, %v593
    %vm595 = vweird.f32 %v544
    %vm596 = vweird.f32 %v590
    %vm597 = vmor %vm595, %vm596
    %v598 = vsel %vm597, %v590, %v594
    %v599 = vand.u32 2147483647, %v544
    %vm600 = vcmp.eq.f32.partialorder %v599, 8.507059e+37
    %v601 = vand.u32 %v544, 2147483648
    %v602 = vor.u32 1.1754944e-38, %v601
    %v603 = vsel %vm600, %v602, %v598
    %v604 = vmul.f32 1.0, %v603
    %v605 = vmul.f32 %v604, 2.0
    %v606 = vsub.f32 %v605, 1.0
    %v607 = vmul.f32 %v574, %v437
    %v608 = vmul.f32 %v559, %v606
    %v609 = vadd.f32 %v607, %v608
    %v610 = vtanh.pop %v609
    %v611 = vmul.f32 %v589, %v610
    %s612 = scalar_lea.vmem [#allocation2], 64
    %v613 = vld [vmem:[%s612] sm:$0xff]
    %v614 = vld [vmem:[%s612 + $0x8] sm:$0xff]
    %v615 = vld [vmem:[%s612 + $0x10] sm:$0xff]
    %v616 = vld [vmem:[%s612 + $0x18] sm:$0xff]
    %617 = vmatpush.msra.mxu0 %v269
    %618 = vmatpush.msra.mxu0 %v265
    %619 = vmatpush.msra.mxu0 %v261
    %620 = vmatpush.msra.mxu0 %v257
    %621 = vmatpush.msra.mxu0 %v253
    %622 = vmatpush.msra.mxu0 %v249
    %623 = vmatpush.msra.mxu0 %v245
    %624 = vmatpush.msra.mxu0 %v241
    %625 = vmatpush.msra.mxu0 %v237
    %626 = vmatpush.msra.mxu0 %v233
    %627 = vmatpush.msra.mxu0 %v229
    %628 = vmatpush.msra.mxu0 %v225
    %629 = vmatpush.msra.mxu0 %v221
    %630 = vmatpush.msra.mxu0 %v217
    %631 = vmatpush.msra.mxu0 %v213
    %632 = vmatpush.msra.mxu0 %v209
    %633 = vmatmul.f32.gmra.mxu0 %v611
    %v634 = vpop.f32.mrf.mxu0
    %v635 = vadd.f32 0.0, %v634
    %636 = vdwg.mxu0
    %637 = vmatpush.msra.mxu0 %v270
    %638 = vmatpush.msra.mxu0 %v266
    %639 = vmatpush.msra.mxu0 %v262
    %640 = vmatpush.msra.mxu0 %v258
    %641 = vmatpush.msra.mxu0 %v254
    %642 = vmatpush.msra.mxu0 %v250
    %643 = vmatpush.msra.mxu0 %v246
    %644 = vmatpush.msra.mxu0 %v242
    %645 = vmatpush.msra.mxu0 %v238
    %646 = vmatpush.msra.mxu0 %v234
    %647 = vmatpush.msra.mxu0 %v230
    %648 = vmatpush.msra.mxu0 %v226
    %649 = vmatpush.msra.mxu0 %v222
    %650 = vmatpush.msra.mxu0 %v218
    %651 = vmatpush.msra.mxu0 %v214
    %652 = vmatpush.msra.mxu0 %v210
    %653 = vmatmul.f32.gmra.mxu0 %v611
    %v654 = vpop.f32.mrf.mxu0
    %v655 = vadd.f32 0.0, %v654
    %656 = vdwg.mxu0
    %657 = vmatpush.msra.mxu0 %v271
    %658 = vmatpush.msra.mxu0 %v267
    %659 = vmatpush.msra.mxu0 %v263
    %660 = vmatpush.msra.mxu0 %v259
    %661 = vmatpush.msra.mxu0 %v255
    %662 = vmatpush.msra.mxu0 %v251
    %663 = vmatpush.msra.mxu0 %v247
    %664 = vmatpush.msra.mxu0 %v243
    %665 = vmatpush.msra.mxu0 %v239
    %666 = vmatpush.msra.mxu0 %v235
    %667 = vmatpush.msra.mxu0 %v231
    %668 = vmatpush.msra.mxu0 %v227
    %669 = vmatpush.msra.mxu0 %v223
    %670 = vmatpush.msra.mxu0 %v219
    %671 = vmatpush.msra.mxu0 %v215
    %672 = vmatpush.msra.mxu0 %v211
    %673 = vmatmul.f32.gmra.mxu0 %v611
    %v674 = vpop.f32.mrf.mxu0
    %v675 = vadd.f32 0.0, %v674
    %676 = vdwg.mxu0
    %677 = vmatpush.msra.mxu0 %v272
    %678 = vmatpush.msra.mxu0 %v268
    %679 = vmatpush.msra.mxu0 %v264
    %680 = vmatpush.msra.mxu0 %v260
    %681 = vmatpush.msra.mxu0 %v256
    %682 = vmatpush.msra.mxu0 %v252
    %683 = vmatpush.msra.mxu0 %v248
    %684 = vmatpush.msra.mxu0 %v244
    %685 = vmatpush.msra.mxu0 %v240
    %686 = vmatpush.msra.mxu0 %v236
    %687 = vmatpush.msra.mxu0 %v232
    %688 = vmatpush.msra.mxu0 %v228
    %689 = vmatpush.msra.mxu0 %v224
    %690 = vmatpush.msra.mxu0 %v220
    %691 = vmatpush.msra.mxu0 %v216
    %692 = vmatpush.msra.mxu0 %v212
    %693 = vmatmul.f32.gmra.mxu0 %v611
    %v694 = vpop.f32.mrf.mxu0
    %v695 = vadd.f32 0.0, %v694
    %696 = vdwg.mxu0
    %v697 = vadd.f32 %v613, %v635
    %v698 = vadd.f32 %v614, %v655
    %v699 = vadd.f32 %v615, %v675
    %v700 = vadd.f32 %v616, %v695
    %v701 = vxor.u32 %v697, 2147483648
    %v702 = vxor.u32 %v698, 2147483648
    %v703 = vxor.u32 %v699, 2147483648
    %v704 = vxor.u32 %v700, 2147483648
    %v705 = vmul.f32 %v701, 1.442695
    %v706 = vpow.pop %v705
    %v707 = vmul.f32 %v702, 1.442695
    %v708 = vpow.pop %v707
    %v709 = vmul.f32 %v703, 1.442695
    %v710 = vpow.pop %v709
    %v711 = vmul.f32 %v704, 1.442695
    %v712 = vpow.pop %v711
    %v713 = vadd.f32 %v706, 1.0
    %v714 = vadd.f32 %v708, 1.0
    %v715 = vadd.f32 %v710, 1.0
    %v716 = vadd.f32 %v712, 1.0
    %v717 = vrcp.pop %v713
    %v718 = vmul.f32 %v713, %v717
    %v719 = vsub.f32 1.0, %v718
    %v720 = vmul.f32 %v717, %v719
    %v721 = vadd.f32 %v717, %v720
    %vm722 = vweird.f32 %v713
    %vm723 = vweird.f32 %v717
    %vm724 = vmor %vm722, %vm723
    %v725 = vsel %vm724, %v717, %v721
    %v726 = vand.u32 2147483647, %v713
    %vm727 = vcmp.eq.f32.partialorder %v726, 8.507059e+37
    %v728 = vand.u32 %v713, 2147483648
    %v729 = vor.u32 1.1754944e-38, %v728
    %v730 = vsel %vm727, %v729, %v725
    %v731 = vmul.f32 1.0, %v730
    %v732 = vrcp.pop %v714
    %v733 = vmul.f32 %v714, %v732
    %v734 = vsub.f32 1.0, %v733
    %v735 = vmul.f32 %v732, %v734
    %v736 = vadd.f32 %v732, %v735
    %vm737 = vweird.f32 %v714
    %vm738 = vweird.f32 %v732
    %vm739 = vmor %vm737, %vm738
    %v740 = vsel %vm739, %v732, %v736
    %v741 = vand.u32 2147483647, %v714
    %vm742 = vcmp.eq.f32.partialorder %v741, 8.507059e+37
    %v743 = vand.u32 %v714, 2147483648
    %v744 = vor.u32 1.1754944e-38, %v743
    %v745 = vsel %vm742, %v744, %v740
    %v746 = vmul.f32 1.0, %v745
    %v747 = vrcp.pop %v715
    %v748 = vmul.f32 %v715, %v747
    %v749 = vsub.f32 1.0, %v748
    %v750 = vmul.f32 %v747, %v749
    %v751 = vadd.f32 %v747, %v750
    %vm752 = vweird.f32 %v715
    %vm753 = vweird.f32 %v747
    %vm754 = vmor %vm752, %vm753
    %v755 = vsel %vm754, %v747, %v751
    %v756 = vand.u32 2147483647, %v715
    %vm757 = vcmp.eq.f32.partialorder %v756, 8.507059e+37
    %v758 = vand.u32 %v715, 2147483648
    %v759 = vor.u32 1.1754944e-38, %v758
    %v760 = vsel %vm757, %v759, %v755
    %v761 = vmul.f32 1.0, %v760
    %v762 = vrcp.pop %v716
    %v763 = vmul.f32 %v716, %v762
    %v764 = vsub.f32 1.0, %v763
    %v765 = vmul.f32 %v762, %v764
    %v766 = vadd.f32 %v762, %v765
    %vm767 = vweird.f32 %v716
    %vm768 = vweird.f32 %v762
    %vm769 = vmor %vm767, %vm768
    %v770 = vsel %vm769, %v762, %v766
    %v771 = vand.u32 2147483647, %v716
    %vm772 = vcmp.eq.f32.partialorder %v771, 8.507059e+37
    %v773 = vand.u32 %v716, 2147483648
    %v774 = vor.u32 1.1754944e-38, %v773
    %v775 = vsel %vm772, %v774, %v770
    %v776 = vmul.f32 1.0, %v775
    %v777 = vmul.f32 %v776, 2.0
    %v778 = vsub.f32 %v777, 1.0
    %v779 = vmul.f32 %v746, %v609
    %v780 = vmul.f32 %v731, %v778
    %v781 = vadd.f32 %v779, %v780
    %v782 = vtanh.pop %v781
    %v783 = vmul.f32 %v761, %v782
    %s784 = scalar_lea.vmem [#allocation2], 96
    %v785 = vld [vmem:[%s784] sm:$0xff]
    %v786 = vld [vmem:[%s784 + $0x8] sm:$0xff]
    %v787 = vld [vmem:[%s784 + $0x10] sm:$0xff]
    %v788 = vld [vmem:[%s784 + $0x18] sm:$0xff]
    %789 = vmatpush.msra.mxu0 %v269
    %790 = vmatpush.msra.mxu0 %v265
    %791 = vmatpush.msra.mxu0 %v261
    %792 = vmatpush.msra.mxu0 %v257
    %793 = vmatpush.msra.mxu0 %v253
    %794 = vmatpush.msra.mxu0 %v249
    %795 = vmatpush.msra.mxu0 %v245
    %796 = vmatpush.msra.mxu0 %v241
    %797 = vmatpush.msra.mxu0 %v237
    %798 = vmatpush.msra.mxu0 %v233
    %799 = vmatpush.msra.mxu0 %v229
    %800 = vmatpush.msra.mxu0 %v225
    %801 = vmatpush.msra.mxu0 %v221
    %802 = vmatpush.msra.mxu0 %v217
    %803 = vmatpush.msra.mxu0 %v213
    %804 = vmatpush.msra.mxu0 %v209
    %805 = vmatmul.f32.gmra.mxu0 %v783
    %v806 = vpop.f32.mrf.mxu0
    %v807 = vadd.f32 0.0, %v806
    %808 = vdwg.mxu0
    %809 = vmatpush.msra.mxu0 %v270
    %810 = vmatpush.msra.mxu0 %v266
    %811 = vmatpush.msra.mxu0 %v262
    %812 = vmatpush.msra.mxu0 %v258
    %813 = vmatpush.msra.mxu0 %v254
    %814 = vmatpush.msra.mxu0 %v250
    %815 = vmatpush.msra.mxu0 %v246
    %816 = vmatpush.msra.mxu0 %v242
    %817 = vmatpush.msra.mxu0 %v238
    %818 = vmatpush.msra.mxu0 %v234
    %819 = vmatpush.msra.mxu0 %v230
    %820 = vmatpush.msra.mxu0 %v226
    %821 = vmatpush.msra.mxu0 %v222
    %822 = vmatpush.msra.mxu0 %v218
    %823 = vmatpush.msra.mxu0 %v214
    %824 = vmatpush.msra.mxu0 %v210
    %825 = vmatmul.f32.gmra.mxu0 %v783
    %v826 = vpop.f32.mrf.mxu0
    %v827 = vadd.f32 0.0, %v826
    %828 = vdwg.mxu0
    %829 = vmatpush.msra.mxu0 %v271
    %830 = vmatpush.msra.mxu0 %v267
    %831 = vmatpush.msra.mxu0 %v263
    %832 = vmatpush.msra.mxu0 %v259
    %833 = vmatpush.msra.mxu0 %v255
    %834 = vmatpush.msra.mxu0 %v251
    %835 = vmatpush.msra.mxu0 %v247
    %836 = vmatpush.msra.mxu0 %v243
    %837 = vmatpush.msra.mxu0 %v239
    %838 = vmatpush.msra.mxu0 %v235
    %839 = vmatpush.msra.mxu0 %v231
    %840 = vmatpush.msra.mxu0 %v227
    %841 = vmatpush.msra.mxu0 %v223
    %842 = vmatpush.msra.mxu0 %v219
    %843 = vmatpush.msra.mxu0 %v215
    %844 = vmatpush.msra.mxu0 %v211
    %845 = vmatmul.f32.gmra.mxu0 %v783
    %v846 = vpop.f32.mrf.mxu0
    %v847 = vadd.f32 0.0, %v846
    %848 = vdwg.mxu0
    %849 = vmatpush.msra.mxu0 %v272
    %850 = vmatpush.msra.mxu0 %v268
    %851 = vmatpush.msra.mxu0 %v264
    %852 = vmatpush.msra.mxu0 %v260
    %853 = vmatpush.msra.mxu0 %v256
    %854 = vmatpush.msra.mxu0 %v252
    %855 = vmatpush.msra.mxu0 %v248
    %856 = vmatpush.msra.mxu0 %v244
    %857 = vmatpush.msra.mxu0 %v240
    %858 = vmatpush.msra.mxu0 %v236
    %859 = vmatpush.msra.mxu0 %v232
    %860 = vmatpush.msra.mxu0 %v228
    %861 = vmatpush.msra.mxu0 %v224
    %862 = vmatpush.msra.mxu0 %v220
    %863 = vmatpush.msra.mxu0 %v216
    %864 = vmatpush.msra.mxu0 %v212
    %865 = vmatmul.f32.gmra.mxu0 %v783
    %v866 = vpop.f32.mrf.mxu0
    %v867 = vadd.f32 0.0, %v866
    %868 = vdwg.mxu0
    %v869 = vadd.f32 %v785, %v807
    %v870 = vadd.f32 %v786, %v827
    %v871 = vadd.f32 %v787, %v847
    %v872 = vadd.f32 %v788, %v867
    %v873 = vxor.u32 %v869, 2147483648
    %v874 = vxor.u32 %v870, 2147483648
    %v875 = vxor.u32 %v871, 2147483648
    %v876 = vxor.u32 %v872, 2147483648
    %v877 = vmul.f32 %v873, 1.442695
    %v878 = vpow.pop %v877
    %v879 = vmul.f32 %v874, 1.442695
    %v880 = vpow.pop %v879
    %v881 = vmul.f32 %v875, 1.442695
    %v882 = vpow.pop %v881
    %v883 = vmul.f32 %v876, 1.442695
    %v884 = vpow.pop %v883
    %v885 = vadd.f32 %v878, 1.0
    %v886 = vadd.f32 %v880, 1.0
    %v887 = vadd.f32 %v882, 1.0
    %v888 = vadd.f32 %v884, 1.0
    %v889 = vrcp.pop %v885
    %v890 = vmul.f32 %v885, %v889
    %v891 = vsub.f32 1.0, %v890
    %v892 = vmul.f32 %v889, %v891
    %v893 = vadd.f32 %v889, %v892
    %vm894 = vweird.f32 %v885
    %vm895 = vweird.f32 %v889
    %vm896 = vmor %vm894, %vm895
    %v897 = vsel %vm896, %v889, %v893
    %v898 = vand.u32 2147483647, %v885
    %vm899 = vcmp.eq.f32.partialorder %v898, 8.507059e+37
    %v900 = vand.u32 %v885, 2147483648
    %v901 = vor.u32 1.1754944e-38, %v900
    %v902 = vsel %vm899, %v901, %v897
    %v903 = vmul.f32 1.0, %v902
    %v904 = vrcp.pop %v886
    %v905 = vmul.f32 %v886, %v904
    %v906 = vsub.f32 1.0, %v905
    %v907 = vmul.f32 %v904, %v906
    %v908 = vadd.f32 %v904, %v907
    %vm909 = vweird.f32 %v886
    %vm910 = vweird.f32 %v904
    %vm911 = vmor %vm909, %vm910
    %v912 = vsel %vm911, %v904, %v908
    %v913 = vand.u32 2147483647, %v886
    %vm914 = vcmp.eq.f32.partialorder %v913, 8.507059e+37
    %v915 = vand.u32 %v886, 2147483648
    %v916 = vor.u32 1.1754944e-38, %v915
    %v917 = vsel %vm914, %v916, %v912
    %v918 = vmul.f32 1.0, %v917
    %v919 = vrcp.pop %v887
    %v920 = vmul.f32 %v887, %v919
    %v921 = vsub.f32 1.0, %v920
    %v922 = vmul.f32 %v919, %v921
    %v923 = vadd.f32 %v919, %v922
    %vm924 = vweird.f32 %v887
    %vm925 = vweird.f32 %v919
    %vm926 = vmor %vm924, %vm925
    %v927 = vsel %vm926, %v919, %v923
    %v928 = vand.u32 2147483647, %v887
    %vm929 = vcmp.eq.f32.partialorder %v928, 8.507059e+37
    %v930 = vand.u32 %v887, 2147483648
    %v931 = vor.u32 1.1754944e-38, %v930
    %v932 = vsel %vm929, %v931, %v927
    %v933 = vmul.f32 1.0, %v932
    %v934 = vrcp.pop %v888
    %v935 = vmul.f32 %v888, %v934
    %v936 = vsub.f32 1.0, %v935
    %v937 = vmul.f32 %v934, %v936
    %v938 = vadd.f32 %v934, %v937
    %vm939 = vweird.f32 %v888
    %vm940 = vweird.f32 %v934
    %vm941 = vmor %vm939, %vm940
    %v942 = vsel %vm941, %v934, %v938
    %v943 = vand.u32 2147483647, %v888
    %vm944 = vcmp.eq.f32.partialorder %v943, 8.507059e+37
    %v945 = vand.u32 %v888, 2147483648
    %v946 = vor.u32 1.1754944e-38, %v945
    %v947 = vsel %vm944, %v946, %v942
    %v948 = vmul.f32 1.0, %v947
    %v949 = vmul.f32 %v948, 2.0
    %v950 = vsub.f32 %v949, 1.0
    %v951 = vmul.f32 %v918, %v781
    %v952 = vmul.f32 %v903, %v950
    %v953 = vadd.f32 %v951, %v952
    %v954 = vtanh.pop %v953
    %v955 = vmul.f32 %v933, %v954
    %s956 = scalar_lea.vmem [#allocation2], 128
    %v957 = vld [vmem:[%s956] sm:$0xff]
    %v958 = vld [vmem:[%s956 + $0x8] sm:$0xff]
    %v959 = vld [vmem:[%s956 + $0x10] sm:$0xff]
    %v960 = vld [vmem:[%s956 + $0x18] sm:$0xff]
    %961 = vmatpush.msra.mxu0 %v269
    %962 = vmatpush.msra.mxu0 %v265
    %963 = vmatpush.msra.mxu0 %v261
    %964 = vmatpush.msra.mxu0 %v257
    %965 = vmatpush.msra.mxu0 %v253
    %966 = vmatpush.msra.mxu0 %v249
    %967 = vmatpush.msra.mxu0 %v245
    %968 = vmatpush.msra.mxu0 %v241
    %969 = vmatpush.msra.mxu0 %v237
    %970 = vmatpush.msra.mxu0 %v233
    %971 = vmatpush.msra.mxu0 %v229
    %972 = vmatpush.msra.mxu0 %v225
    %973 = vmatpush.msra.mxu0 %v221
    %974 = vmatpush.msra.mxu0 %v217
    %975 = vmatpush.msra.mxu0 %v213
    %976 = vmatpush.msra.mxu0 %v209
    %977 = vmatmul.f32.gmra.mxu0 %v955
    %v978 = vpop.f32.mrf.mxu0
    %v979 = vadd.f32 0.0, %v978
    %980 = vdwg.mxu0
    %981 = vmatpush.msra.mxu0 %v270
    %982 = vmatpush.msra.mxu0 %v266
    %983 = vmatpush.msra.mxu0 %v262
    %984 = vmatpush.msra.mxu0 %v258
    %985 = vmatpush.msra.mxu0 %v254
    %986 = vmatpush.msra.mxu0 %v250
    %987 = vmatpush.msra.mxu0 %v246
    %988 = vmatpush.msra.mxu0 %v242
    %989 = vmatpush.msra.mxu0 %v238
    %990 = vmatpush.msra.mxu0 %v234
    %991 = vmatpush.msra.mxu0 %v230
    %992 = vmatpush.msra.mxu0 %v226
    %993 = vmatpush.msra.mxu0 %v222
    %994 = vmatpush.msra.mxu0 %v218
    %995 = vmatpush.msra.mxu0 %v214
    %996 = vmatpush.msra.mxu0 %v210
    %997 = vmatmul.f32.gmra.mxu0 %v955
    %v998 = vpop.f32.mrf.mxu0
    %v999 = vadd.f32 0.0, %v998
    %1000 = vdwg.mxu0
    %1001 = vmatpush.msra.mxu0 %v271
    %1002 = vmatpush.msra.mxu0 %v267
    %1003 = vmatpush.msra.mxu0 %v263
    %1004 = vmatpush.msra.mxu0 %v259
    %1005 = vmatpush.msra.mxu0 %v255
    %1006 = vmatpush.msra.mxu0 %v251
    %1007 = vmatpush.msra.mxu0 %v247
    %1008 = vmatpush.msra.mxu0 %v243
    %1009 = vmatpush.msra.mxu0 %v239
    %1010 = vmatpush.msra.mxu0 %v235
    %1011 = vmatpush.msra.mxu0 %v231
    %1012 = vmatpush.msra.mxu0 %v227
    %1013 = vmatpush.msra.mxu0 %v223
    %1014 = vmatpush.msra.mxu0 %v219
    %1015 = vmatpush.msra.mxu0 %v215
    %1016 = vmatpush.msra.mxu0 %v211
    %1017 = vmatmul.f32.gmra.mxu0 %v955
    %v1018 = vpop.f32.mrf.mxu0
    %v1019 = vadd.f32 0.0, %v1018
    %1020 = vdwg.mxu0
    %1021 = vmatpush.msra.mxu0 %v272
    %1022 = vmatpush.msra.mxu0 %v268
    %1023 = vmatpush.msra.mxu0 %v264
    %1024 = vmatpush.msra.mxu0 %v260
    %1025 = vmatpush.msra.mxu0 %v256
    %1026 = vmatpush.msra.mxu0 %v252
    %1027 = vmatpush.msra.mxu0 %v248
    %1028 = vmatpush.msra.mxu0 %v244
    %1029 = vmatpush.msra.mxu0 %v240
    %1030 = vmatpush.msra.mxu0 %v236
    %1031 = vmatpush.msra.mxu0 %v232
    %1032 = vmatpush.msra.mxu0 %v228
    %1033 = vmatpush.msra.mxu0 %v224
    %1034 = vmatpush.msra.mxu0 %v220
    %1035 = vmatpush.msra.mxu0 %v216
    %1036 = vmatpush.msra.mxu0 %v212
    %1037 = vmatmul.f32.gmra.mxu0 %v955
    %v1038 = vpop.f32.mrf.mxu0
    %v1039 = vadd.f32 0.0, %v1038
    %1040 = vdwg.mxu0
    %v1041 = vadd.f32 %v957, %v979
    %v1042 = vadd.f32 %v958, %v999
    %v1043 = vadd.f32 %v959, %v1019
    %v1044 = vadd.f32 %v960, %v1039
    %v1045 = vxor.u32 %v1041, 2147483648
    %v1046 = vxor.u32 %v1042, 2147483648
    %v1047 = vxor.u32 %v1043, 2147483648
    %v1048 = vxor.u32 %v1044, 2147483648
    %v1049 = vmul.f32 %v1045, 1.442695
    %v1050 = vpow.pop %v1049
    %v1051 = vmul.f32 %v1046, 1.442695
    %v1052 = vpow.pop %v1051
    %v1053 = vmul.f32 %v1047, 1.442695
    %v1054 = vpow.pop %v1053
    %v1055 = vmul.f32 %v1048, 1.442695
    %v1056 = vpow.pop %v1055
    %v1057 = vadd.f32 %v1050, 1.0
    %v1058 = vadd.f32 %v1052, 1.0
    %v1059 = vadd.f32 %v1054, 1.0
    %v1060 = vadd.f32 %v1056, 1.0
    %v1061 = vrcp.pop %v1057
    %v1062 = vmul.f32 %v1057, %v1061
    %v1063 = vsub.f32 1.0, %v1062
    %v1064 = vmul.f32 %v1061, %v1063
    %v1065 = vadd.f32 %v1061, %v1064
    %vm1066 = vweird.f32 %v1057
    %vm1067 = vweird.f32 %v1061
    %vm1068 = vmor %vm1066, %vm1067
    %v1069 = vsel %vm1068, %v1061, %v1065
    %v1070 = vand.u32 2147483647, %v1057
    %vm1071 = vcmp.eq.f32.partialorder %v1070, 8.507059e+37
    %v1072 = vand.u32 %v1057, 2147483648
    %v1073 = vor.u32 1.1754944e-38, %v1072
    %v1074 = vsel %vm1071, %v1073, %v1069
    %v1075 = vmul.f32 1.0, %v1074
    %v1076 = vrcp.pop %v1058
    %v1077 = vmul.f32 %v1058, %v1076
    %v1078 = vsub.f32 1.0, %v1077
    %v1079 = vmul.f32 %v1076, %v1078
    %v1080 = vadd.f32 %v1076, %v1079
    %vm1081 = vweird.f32 %v1058
    %vm1082 = vweird.f32 %v1076
    %vm1083 = vmor %vm1081, %vm1082
    %v1084 = vsel %vm1083, %v1076, %v1080
    %v1085 = vand.u32 2147483647, %v1058
    %vm1086 = vcmp.eq.f32.partialorder %v1085, 8.507059e+37
    %v1087 = vand.u32 %v1058, 2147483648
    %v1088 = vor.u32 1.1754944e-38, %v1087
    %v1089 = vsel %vm1086, %v1088, %v1084
    %v1090 = vmul.f32 1.0, %v1089
    %v1091 = vrcp.pop %v1059
    %v1092 = vmul.f32 %v1059, %v1091
    %v1093 = vsub.f32 1.0, %v1092
    %v1094 = vmul.f32 %v1091, %v1093
    %v1095 = vadd.f32 %v1091, %v1094
    %vm1096 = vweird.f32 %v1059
    %vm1097 = vweird.f32 %v1091
    %vm1098 = vmor %vm1096, %vm1097
    %v1099 = vsel %vm1098, %v1091, %v1095
    %v1100 = vand.u32 2147483647, %v1059
    %vm1101 = vcmp.eq.f32.partialorder %v1100, 8.507059e+37
    %v1102 = vand.u32 %v1059, 2147483648
    %v1103 = vor.u32 1.1754944e-38, %v1102
    %v1104 = vsel %vm1101, %v1103, %v1099
    %v1105 = vmul.f32 1.0, %v1104
    %v1106 = vrcp.pop %v1060
    %v1107 = vmul.f32 %v1060, %v1106
    %v1108 = vsub.f32 1.0, %v1107
    %v1109 = vmul.f32 %v1106, %v1108
    %v1110 = vadd.f32 %v1106, %v1109
    %vm1111 = vweird.f32 %v1060
    %vm1112 = vweird.f32 %v1106
    %vm1113 = vmor %vm1111, %vm1112
    %v1114 = vsel %vm1113, %v1106, %v1110
    %v1115 = vand.u32 2147483647, %v1060
    %vm1116 = vcmp.eq.f32.partialorder %v1115, 8.507059e+37
    %v1117 = vand.u32 %v1060, 2147483648
    %v1118 = vor.u32 1.1754944e-38, %v1117
    %v1119 = vsel %vm1116, %v1118, %v1114
    %v1120 = vmul.f32 1.0, %v1119
    %v1121 = vmul.f32 %v1120, 2.0
    %v1122 = vsub.f32 %v1121, 1.0
    %v1123 = vmul.f32 %v1090, %v953
    %v1124 = vmul.f32 %v1075, %v1122
    %v1125 = vadd.f32 %v1123, %v1124
    %v1126 = vtanh.pop %v1125
    %v1127 = vmul.f32 %v1105, %v1126
    %s1128 = scalar_lea.vmem [#allocation2], 160
    %v1129 = vld [vmem:[%s1128] sm:$0xff]
    %v1130 = vld [vmem:[%s1128 + $0x8] sm:$0xff]
    %v1131 = vld [vmem:[%s1128 + $0x10] sm:$0xff]
    %v1132 = vld [vmem:[%s1128 + $0x18] sm:$0xff]
    %1133 = vmatpush.msra.mxu0 %v269
    %1134 = vmatpush.msra.mxu0 %v265
    %1135 = vmatpush.msra.mxu0 %v261
    %1136 = vmatpush.msra.mxu0 %v257
    %1137 = vmatpush.msra.mxu0 %v253
    %1138 = vmatpush.msra.mxu0 %v249
    %1139 = vmatpush.msra.mxu0 %v245
    %1140 = vmatpush.msra.mxu0 %v241
    %1141 = vmatpush.msra.mxu0 %v237
    %1142 = vmatpush.msra.mxu0 %v233
    %1143 = vmatpush.msra.mxu0 %v229
    %1144 = vmatpush.msra.mxu0 %v225
    %1145 = vmatpush.msra.mxu0 %v221
    %1146 = vmatpush.msra.mxu0 %v217
    %1147 = vmatpush.msra.mxu0 %v213
    %1148 = vmatpush.msra.mxu0 %v209
    %1149 = vmatmul.f32.gmra.mxu0 %v1127
    %v1150 = vpop.f32.mrf.mxu0
    %v1151 = vadd.f32 0.0, %v1150
    %1152 = vdwg.mxu0
    %1153 = vmatpush.msra.mxu0 %v270
    %1154 = vmatpush.msra.mxu0 %v266
    %1155 = vmatpush.msra.mxu0 %v262
    %1156 = vmatpush.msra.mxu0 %v258
    %1157 = vmatpush.msra.mxu0 %v254
    %1158 = vmatpush.msra.mxu0 %v250
    %1159 = vmatpush.msra.mxu0 %v246
    %1160 = vmatpush.msra.mxu0 %v242
    %1161 = vmatpush.msra.mxu0 %v238
    %1162 = vmatpush.msra.mxu0 %v234
    %1163 = vmatpush.msra.mxu0 %v230
    %1164 = vmatpush.msra.mxu0 %v226
    %1165 = vmatpush.msra.mxu0 %v222
    %1166 = vmatpush.msra.mxu0 %v218
    %1167 = vmatpush.msra.mxu0 %v214
    %1168 = vmatpush.msra.mxu0 %v210
    %1169 = vmatmul.f32.gmra.mxu0 %v1127
    %v1170 = vpop.f32.mrf.mxu0
    %v1171 = vadd.f32 0.0, %v1170
    %1172 = vdwg.mxu0
    %1173 = vmatpush.msra.mxu0 %v271
    %1174 = vmatpush.msra.mxu0 %v267
    %1175 = vmatpush.msra.mxu0 %v263
    %1176 = vmatpush.msra.mxu0 %v259
    %1177 = vmatpush.msra.mxu0 %v255
    %1178 = vmatpush.msra.mxu0 %v251
    %1179 = vmatpush.msra.mxu0 %v247
    %1180 = vmatpush.msra.mxu0 %v243
    %1181 = vmatpush.msra.mxu0 %v239
    %1182 = vmatpush.msra.mxu0 %v235
    %1183 = vmatpush.msra.mxu0 %v231
    %1184 = vmatpush.msra.mxu0 %v227
    %1185 = vmatpush.msra.mxu0 %v223
    %1186 = vmatpush.msra.mxu0 %v219
    %1187 = vmatpush.msra.mxu0 %v215
    %1188 = vmatpush.msra.mxu0 %v211
    %1189 = vmatmul.f32.gmra.mxu0 %v1127
    %v1190 = vpop.f32.mrf.mxu0
    %v1191 = vadd.f32 0.0, %v1190
    %1192 = vdwg.mxu0
    %1193 = vmatpush.msra.mxu0 %v272
    %1194 = vmatpush.msra.mxu0 %v268
    %1195 = vmatpush.msra.mxu0 %v264
    %1196 = vmatpush.msra.mxu0 %v260
    %1197 = vmatpush.msra.mxu0 %v256
    %1198 = vmatpush.msra.mxu0 %v252
    %1199 = vmatpush.msra.mxu0 %v248
    %1200 = vmatpush.msra.mxu0 %v244
    %1201 = vmatpush.msra.mxu0 %v240
    %1202 = vmatpush.msra.mxu0 %v236
    %1203 = vmatpush.msra.mxu0 %v232
    %1204 = vmatpush.msra.mxu0 %v228
    %1205 = vmatpush.msra.mxu0 %v224
    %1206 = vmatpush.msra.mxu0 %v220
    %1207 = vmatpush.msra.mxu0 %v216
    %1208 = vmatpush.msra.mxu0 %v212
    %1209 = vmatmul.f32.gmra.mxu0 %v1127
    %v1210 = vpop.f32.mrf.mxu0
    %v1211 = vadd.f32 0.0, %v1210
    %1212 = vdwg.mxu0
    %v1213 = vadd.f32 %v1129, %v1151
    %v1214 = vadd.f32 %v1130, %v1171
    %v1215 = vadd.f32 %v1131, %v1191
    %v1216 = vadd.f32 %v1132, %v1211
    %v1217 = vxor.u32 %v1213, 2147483648
    %v1218 = vxor.u32 %v1214, 2147483648
    %v1219 = vxor.u32 %v1215, 2147483648
    %v1220 = vxor.u32 %v1216, 2147483648
    %v1221 = vmul.f32 %v1217, 1.442695
    %v1222 = vpow.pop %v1221
    %v1223 = vmul.f32 %v1218, 1.442695
    %v1224 = vpow.pop %v1223
    %v1225 = vmul.f32 %v1219, 1.442695
    %v1226 = vpow.pop %v1225
    %v1227 = vmul.f32 %v1220, 1.442695
    %v1228 = vpow.pop %v1227
    %v1229 = vadd.f32 %v1222, 1.0
    %v1230 = vadd.f32 %v1224, 1.0
    %v1231 = vadd.f32 %v1226, 1.0
    %v1232 = vadd.f32 %v1228, 1.0
    %v1233 = vrcp.pop %v1229
    %v1234 = vmul.f32 %v1229, %v1233
    %v1235 = vsub.f32 1.0, %v1234
    %v1236 = vmul.f32 %v1233, %v1235
    %v1237 = vadd.f32 %v1233, %v1236
    %vm1238 = vweird.f32 %v1229
    %vm1239 = vweird.f32 %v1233
    %vm1240 = vmor %vm1238, %vm1239
    %v1241 = vsel %vm1240, %v1233, %v1237
    %v1242 = vand.u32 2147483647, %v1229
    %vm1243 = vcmp.eq.f32.partialorder %v1242, 8.507059e+37
    %v1244 = vand.u32 %v1229, 2147483648
    %v1245 = vor.u32 1.1754944e-38, %v1244
    %v1246 = vsel %vm1243, %v1245, %v1241
    %v1247 = vmul.f32 1.0, %v1246
    %v1248 = vrcp.pop %v1230
    %v1249 = vmul.f32 %v1230, %v1248
    %v1250 = vsub.f32 1.0, %v1249
    %v1251 = vmul.f32 %v1248, %v1250
    %v1252 = vadd.f32 %v1248, %v1251
    %vm1253 = vweird.f32 %v1230
    %vm1254 = vweird.f32 %v1248
    %vm1255 = vmor %vm1253, %vm1254
    %v1256 = vsel %vm1255, %v1248, %v1252
    %v1257 = vand.u32 2147483647, %v1230
    %vm1258 = vcmp.eq.f32.partialorder %v1257, 8.507059e+37
    %v1259 = vand.u32 %v1230, 2147483648
    %v1260 = vor.u32 1.1754944e-38, %v1259
    %v1261 = vsel %vm1258, %v1260, %v1256
    %v1262 = vmul.f32 1.0, %v1261
    %v1263 = vrcp.pop %v1231
    %v1264 = vmul.f32 %v1231, %v1263
    %v1265 = vsub.f32 1.0, %v1264
    %v1266 = vmul.f32 %v1263, %v1265
    %v1267 = vadd.f32 %v1263, %v1266
    %vm1268 = vweird.f32 %v1231
    %vm1269 = vweird.f32 %v1263
    %vm1270 = vmor %vm1268, %vm1269
    %v1271 = vsel %vm1270, %v1263, %v1267
    %v1272 = vand.u32 2147483647, %v1231
    %vm1273 = vcmp.eq.f32.partialorder %v1272, 8.507059e+37
    %v1274 = vand.u32 %v1231, 2147483648
    %v1275 = vor.u32 1.1754944e-38, %v1274
    %v1276 = vsel %vm1273, %v1275, %v1271
    %v1277 = vmul.f32 1.0, %v1276
    %v1278 = vrcp.pop %v1232
    %v1279 = vmul.f32 %v1232, %v1278
    %v1280 = vsub.f32 1.0, %v1279
    %v1281 = vmul.f32 %v1278, %v1280
    %v1282 = vadd.f32 %v1278, %v1281
    %vm1283 = vweird.f32 %v1232
    %vm1284 = vweird.f32 %v1278
    %vm1285 = vmor %vm1283, %vm1284
    %v1286 = vsel %vm1285, %v1278, %v1282
    %v1287 = vand.u32 2147483647, %v1232
    %vm1288 = vcmp.eq.f32.partialorder %v1287, 8.507059e+37
    %v1289 = vand.u32 %v1232, 2147483648
    %v1290 = vor.u32 1.1754944e-38, %v1289
    %v1291 = vsel %vm1288, %v1290, %v1286
    %v1292 = vmul.f32 1.0, %v1291
    %v1293 = vmul.f32 %v1292, 2.0
    %v1294 = vsub.f32 %v1293, 1.0
    %v1295 = vmul.f32 %v1262, %v1125
    %v1296 = vmul.f32 %v1247, %v1294
    %v1297 = vadd.f32 %v1295, %v1296
    %v1298 = vtanh.pop %v1297
    %v1299 = vmul.f32 %v1277, %v1298
    %s1300 = scalar_lea.vmem [#allocation2], 192
    %v1301 = vld [vmem:[%s1300] sm:$0xff]
    %v1302 = vld [vmem:[%s1300 + $0x8] sm:$0xff]
    %v1303 = vld [vmem:[%s1300 + $0x10] sm:$0xff]
    %v1304 = vld [vmem:[%s1300 + $0x18] sm:$0xff]
    %1305 = vmatpush.msra.mxu0 %v269
    %1306 = vmatpush.msra.mxu0 %v265
    %1307 = vmatpush.msra.mxu0 %v261
    %1308 = vmatpush.msra.mxu0 %v257
    %1309 = vmatpush.msra.mxu0 %v253
    %1310 = vmatpush.msra.mxu0 %v249
    %1311 = vmatpush.msra.mxu0 %v245
    %1312 = vmatpush.msra.mxu0 %v241
    %1313 = vmatpush.msra.mxu0 %v237
    %1314 = vmatpush.msra.mxu0 %v233
    %1315 = vmatpush.msra.mxu0 %v229
    %1316 = vmatpush.msra.mxu0 %v225
    %1317 = vmatpush.msra.mxu0 %v221
    %1318 = vmatpush.msra.mxu0 %v217
    %1319 = vmatpush.msra.mxu0 %v213
    %1320 = vmatpush.msra.mxu0 %v209
    %1321 = vmatmul.f32.gmra.mxu0 %v1299
    %v1322 = vpop.f32.mrf.mxu0
    %v1323 = vadd.f32 0.0, %v1322
    %1324 = vdwg.mxu0
    %1325 = vmatpush.msra.mxu0 %v270
    %1326 = vmatpush.msra.mxu0 %v266
    %1327 = vmatpush.msra.mxu0 %v262
    %1328 = vmatpush.msra.mxu0 %v258
    %1329 = vmatpush.msra.mxu0 %v254
    %1330 = vmatpush.msra.mxu0 %v250
    %1331 = vmatpush.msra.mxu0 %v246
    %1332 = vmatpush.msra.mxu0 %v242
    %1333 = vmatpush.msra.mxu0 %v238
    %1334 = vmatpush.msra.mxu0 %v234
    %1335 = vmatpush.msra.mxu0 %v230
    %1336 = vmatpush.msra.mxu0 %v226
    %1337 = vmatpush.msra.mxu0 %v222
    %1338 = vmatpush.msra.mxu0 %v218
    %1339 = vmatpush.msra.mxu0 %v214
    %1340 = vmatpush.msra.mxu0 %v210
    %1341 = vmatmul.f32.gmra.mxu0 %v1299
    %v1342 = vpop.f32.mrf.mxu0
    %v1343 = vadd.f32 0.0, %v1342
    %1344 = vdwg.mxu0
    %1345 = vmatpush.msra.mxu0 %v271
    %1346 = vmatpush.msra.mxu0 %v267
    %1347 = vmatpush.msra.mxu0 %v263
    %1348 = vmatpush.msra.mxu0 %v259
    %1349 = vmatpush.msra.mxu0 %v255
    %1350 = vmatpush.msra.mxu0 %v251
    %1351 = vmatpush.msra.mxu0 %v247
    %1352 = vmatpush.msra.mxu0 %v243
    %1353 = vmatpush.msra.mxu0 %v239
    %1354 = vmatpush.msra.mxu0 %v235
    %1355 = vmatpush.msra.mxu0 %v231
    %1356 = vmatpush.msra.mxu0 %v227
    %1357 = vmatpush.msra.mxu0 %v223
    %1358 = vmatpush.msra.mxu0 %v219
    %1359 = vmatpush.msra.mxu0 %v215
    %1360 = vmatpush.msra.mxu0 %v211
    %1361 = vmatmul.f32.gmra.mxu0 %v1299
    %v1362 = vpop.f32.mrf.mxu0
    %v1363 = vadd.f32 0.0, %v1362
    %1364 = vdwg.mxu0
    %1365 = vmatpush.msra.mxu0 %v272
    %1366 = vmatpush.msra.mxu0 %v268
    %1367 = vmatpush.msra.mxu0 %v264
    %1368 = vmatpush.msra.mxu0 %v260
    %1369 = vmatpush.msra.mxu0 %v256
    %1370 = vmatpush.msra.mxu0 %v252
    %1371 = vmatpush.msra.mxu0 %v248
    %1372 = vmatpush.msra.mxu0 %v244
    %1373 = vmatpush.msra.mxu0 %v240
    %1374 = vmatpush.msra.mxu0 %v236
    %1375 = vmatpush.msra.mxu0 %v232
    %1376 = vmatpush.msra.mxu0 %v228
    %1377 = vmatpush.msra.mxu0 %v224
    %1378 = vmatpush.msra.mxu0 %v220
    %1379 = vmatpush.msra.mxu0 %v216
    %1380 = vmatpush.msra.mxu0 %v212
    %1381 = vmatmul.f32.gmra.mxu0 %v1299
    %v1382 = vpop.f32.mrf.mxu0
    %v1383 = vadd.f32 0.0, %v1382
    %1384 = vdwg.mxu0
    %v1385 = vadd.f32 %v1301, %v1323
    %v1386 = vadd.f32 %v1302, %v1343
    %v1387 = vadd.f32 %v1303, %v1363
    %v1388 = vadd.f32 %v1304, %v1383
    %v1389 = vxor.u32 %v1385, 2147483648
    %v1390 = vxor.u32 %v1386, 2147483648
    %v1391 = vxor.u32 %v1387, 2147483648
    %v1392 = vxor.u32 %v1388, 2147483648
    %v1393 = vmul.f32 %v1389, 1.442695
    %v1394 = vpow.pop %v1393
    %v1395 = vmul.f32 %v1390, 1.442695
    %v1396 = vpow.pop %v1395
    %v1397 = vmul.f32 %v1391, 1.442695
    %v1398 = vpow.pop %v1397
    %v1399 = vmul.f32 %v1392, 1.442695
    %v1400 = vpow.pop %v1399
    %v1401 = vadd.f32 %v1394, 1.0
    %v1402 = vadd.f32 %v1396, 1.0
    %v1403 = vadd.f32 %v1398, 1.0
    %v1404 = vadd.f32 %v1400, 1.0
    %v1405 = vrcp.pop %v1401
    %v1406 = vmul.f32 %v1401, %v1405
    %v1407 = vsub.f32 1.0, %v1406
    %v1408 = vmul.f32 %v1405, %v1407
    %v1409 = vadd.f32 %v1405, %v1408
    %vm1410 = vweird.f32 %v1401
    %vm1411 = vweird.f32 %v1405
    %vm1412 = vmor %vm1410, %vm1411
    %v1413 = vsel %vm1412, %v1405, %v1409
    %v1414 = vand.u32 2147483647, %v1401
    %vm1415 = vcmp.eq.f32.partialorder %v1414, 8.507059e+37
    %v1416 = vand.u32 %v1401, 2147483648
    %v1417 = vor.u32 1.1754944e-38, %v1416
    %v1418 = vsel %vm1415, %v1417, %v1413
    %v1419 = vmul.f32 1.0, %v1418
    %v1420 = vrcp.pop %v1402
    %v1421 = vmul.f32 %v1402, %v1420
    %v1422 = vsub.f32 1.0, %v1421
    %v1423 = vmul.f32 %v1420, %v1422
    %v1424 = vadd.f32 %v1420, %v1423
    %vm1425 = vweird.f32 %v1402
    %vm1426 = vweird.f32 %v1420
    %vm1427 = vmor %vm1425, %vm1426
    %v1428 = vsel %vm1427, %v1420, %v1424
    %v1429 = vand.u32 2147483647, %v1402
    %vm1430 = vcmp.eq.f32.partialorder %v1429, 8.507059e+37
    %v1431 = vand.u32 %v1402, 2147483648
    %v1432 = vor.u32 1.1754944e-38, %v1431
    %v1433 = vsel %vm1430, %v1432, %v1428
    %v1434 = vmul.f32 1.0, %v1433
    %v1435 = vrcp.pop %v1403
    %v1436 = vmul.f32 %v1403, %v1435
    %v1437 = vsub.f32 1.0, %v1436
    %v1438 = vmul.f32 %v1435, %v1437
    %v1439 = vadd.f32 %v1435, %v1438
    %vm1440 = vweird.f32 %v1403
    %vm1441 = vweird.f32 %v1435
    %vm1442 = vmor %vm1440, %vm1441
    %v1443 = vsel %vm1442, %v1435, %v1439
    %v1444 = vand.u32 2147483647, %v1403
    %vm1445 = vcmp.eq.f32.partialorder %v1444, 8.507059e+37
    %v1446 = vand.u32 %v1403, 2147483648
    %v1447 = vor.u32 1.1754944e-38, %v1446
    %v1448 = vsel %vm1445, %v1447, %v1443
    %v1449 = vmul.f32 1.0, %v1448
    %v1450 = vrcp.pop %v1404
    %v1451 = vmul.f32 %v1404, %v1450
    %v1452 = vsub.f32 1.0, %v1451
    %v1453 = vmul.f32 %v1450, %v1452
    %v1454 = vadd.f32 %v1450, %v1453
    %vm1455 = vweird.f32 %v1404
    %vm1456 = vweird.f32 %v1450
    %vm1457 = vmor %vm1455, %vm1456
    %v1458 = vsel %vm1457, %v1450, %v1454
    %v1459 = vand.u32 2147483647, %v1404
    %vm1460 = vcmp.eq.f32.partialorder %v1459, 8.507059e+37
    %v1461 = vand.u32 %v1404, 2147483648
    %v1462 = vor.u32 1.1754944e-38, %v1461
    %v1463 = vsel %vm1460, %v1462, %v1458
    %v1464 = vmul.f32 1.0, %v1463
    %v1465 = vmul.f32 %v1464, 2.0
    %v1466 = vsub.f32 %v1465, 1.0
    %v1467 = vmul.f32 %v1434, %v1297
    %v1468 = vmul.f32 %v1419, %v1466
    %v1469 = vadd.f32 %v1467, %v1468
    %v1470 = vtanh.pop %v1469
    %v1471 = vmul.f32 %v1449, %v1470
    %s1472 = scalar_lea.vmem [#allocation2], 224
    %v1473 = vld [vmem:[%s1472] sm:$0xff]
    %v1474 = vld [vmem:[%s1472 + $0x8] sm:$0xff]
    %v1475 = vld [vmem:[%s1472 + $0x10] sm:$0xff]
    %v1476 = vld [vmem:[%s1472 + $0x18] sm:$0xff]
    %1477 = vmatpush.msra.mxu0 %v269
    %1478 = vmatpush.msra.mxu0 %v265
    %1479 = vmatpush.msra.mxu0 %v261
    %1480 = vmatpush.msra.mxu0 %v257
    %1481 = vmatpush.msra.mxu0 %v253
    %1482 = vmatpush.msra.mxu0 %v249
    %1483 = vmatpush.msra.mxu0 %v245
    %1484 = vmatpush.msra.mxu0 %v241
    %1485 = vmatpush.msra.mxu0 %v237
    %1486 = vmatpush.msra.mxu0 %v233
    %1487 = vmatpush.msra.mxu0 %v229
    %1488 = vmatpush.msra.mxu0 %v225
    %1489 = vmatpush.msra.mxu0 %v221
    %1490 = vmatpush.msra.mxu0 %v217
    %1491 = vmatpush.msra.mxu0 %v213
    %1492 = vmatpush.msra.mxu0 %v209
    %1493 = vmatmul.f32.gmra.mxu0 %v1471
    %v1494 = vpop.f32.mrf.mxu0
    %v1495 = vadd.f32 0.0, %v1494
    %1496 = vdwg.mxu0
    %1497 = vmatpush.msra.mxu0 %v270
    %1498 = vmatpush.msra.mxu0 %v266
    %1499 = vmatpush.msra.mxu0 %v262
    %1500 = vmatpush.msra.mxu0 %v258
    %1501 = vmatpush.msra.mxu0 %v254
    %1502 = vmatpush.msra.mxu0 %v250
    %1503 = vmatpush.msra.mxu0 %v246
    %1504 = vmatpush.msra.mxu0 %v242
    %1505 = vmatpush.msra.mxu0 %v238
    %1506 = vmatpush.msra.mxu0 %v234
    %1507 = vmatpush.msra.mxu0 %v230
    %1508 = vmatpush.msra.mxu0 %v226
    %1509 = vmatpush.msra.mxu0 %v222
    %1510 = vmatpush.msra.mxu0 %v218
    %1511 = vmatpush.msra.mxu0 %v214
    %1512 = vmatpush.msra.mxu0 %v210
    %1513 = vmatmul.f32.gmra.mxu0 %v1471
    %v1514 = vpop.f32.mrf.mxu0
    %v1515 = vadd.f32 0.0, %v1514
    %1516 = vdwg.mxu0
    %1517 = vmatpush.msra.mxu0 %v271
    %1518 = vmatpush.msra.mxu0 %v267
    %1519 = vmatpush.msra.mxu0 %v263
    %1520 = vmatpush.msra.mxu0 %v259
    %1521 = vmatpush.msra.mxu0 %v255
    %1522 = vmatpush.msra.mxu0 %v251
    %1523 = vmatpush.msra.mxu0 %v247
    %1524 = vmatpush.msra.mxu0 %v243
    %1525 = vmatpush.msra.mxu0 %v239
    %1526 = vmatpush.msra.mxu0 %v235
    %1527 = vmatpush.msra.mxu0 %v231
    %1528 = vmatpush.msra.mxu0 %v227
    %1529 = vmatpush.msra.mxu0 %v223
    %1530 = vmatpush.msra.mxu0 %v219
    %1531 = vmatpush.msra.mxu0 %v215
    %1532 = vmatpush.msra.mxu0 %v211
    %1533 = vmatmul.f32.gmra.mxu0 %v1471
    %v1534 = vpop.f32.mrf.mxu0
    %v1535 = vadd.f32 0.0, %v1534
    %1536 = vdwg.mxu0
    %1537 = vmatpush.msra.mxu0 %v272
    %1538 = vmatpush.msra.mxu0 %v268
    %1539 = vmatpush.msra.mxu0 %v264
    %1540 = vmatpush.msra.mxu0 %v260
    %1541 = vmatpush.msra.mxu0 %v256
    %1542 = vmatpush.msra.mxu0 %v252
    %1543 = vmatpush.msra.mxu0 %v248
    %1544 = vmatpush.msra.mxu0 %v244
    %1545 = vmatpush.msra.mxu0 %v240
    %1546 = vmatpush.msra.mxu0 %v236
    %1547 = vmatpush.msra.mxu0 %v232
    %1548 = vmatpush.msra.mxu0 %v228
    %1549 = vmatpush.msra.mxu0 %v224
    %1550 = vmatpush.msra.mxu0 %v220
    %1551 = vmatpush.msra.mxu0 %v216
    %1552 = vmatpush.msra.mxu0 %v212
    %1553 = vmatmul.f32.gmra.mxu0 %v1471
    %v1554 = vpop.f32.mrf.mxu0
    %v1555 = vadd.f32 0.0, %v1554
    %1556 = vdwg.mxu0
    %v1557 = vadd.f32 %v1473, %v1495
    %v1558 = vadd.f32 %v1474, %v1515
    %v1559 = vadd.f32 %v1475, %v1535
    %v1560 = vadd.f32 %v1476, %v1555
    %v1561 = vxor.u32 %v1557, 2147483648
    %v1562 = vxor.u32 %v1558, 2147483648
    %v1563 = vxor.u32 %v1559, 2147483648
    %v1564 = vxor.u32 %v1560, 2147483648
    %v1565 = vmul.f32 %v1561, 1.442695
    %v1566 = vpow.pop %v1565
    %v1567 = vmul.f32 %v1562, 1.442695
    %v1568 = vpow.pop %v1567
    %v1569 = vmul.f32 %v1563, 1.442695
    %v1570 = vpow.pop %v1569
    %v1571 = vmul.f32 %v1564, 1.442695
    %v1572 = vpow.pop %v1571
    %v1573 = vadd.f32 %v1566, 1.0
    %v1574 = vadd.f32 %v1568, 1.0
    %v1575 = vadd.f32 %v1570, 1.0
    %v1576 = vadd.f32 %v1572, 1.0
    %v1577 = vrcp.pop %v1573
    %v1578 = vmul.f32 %v1573, %v1577
    %v1579 = vsub.f32 1.0, %v1578
    %v1580 = vmul.f32 %v1577, %v1579
    %v1581 = vadd.f32 %v1577, %v1580
    %vm1582 = vweird.f32 %v1573
    %vm1583 = vweird.f32 %v1577
    %vm1584 = vmor %vm1582, %vm1583
    %v1585 = vsel %vm1584, %v1577, %v1581
    %v1586 = vand.u32 2147483647, %v1573
    %vm1587 = vcmp.eq.f32.partialorder %v1586, 8.507059e+37
    %v1588 = vand.u32 %v1573, 2147483648
    %v1589 = vor.u32 1.1754944e-38, %v1588
    %v1590 = vsel %vm1587, %v1589, %v1585
    %v1591 = vmul.f32 1.0, %v1590
    %v1592 = vrcp.pop %v1574
    %v1593 = vmul.f32 %v1574, %v1592
    %v1594 = vsub.f32 1.0, %v1593
    %v1595 = vmul.f32 %v1592, %v1594
    %v1596 = vadd.f32 %v1592, %v1595
    %vm1597 = vweird.f32 %v1574
    %vm1598 = vweird.f32 %v1592
    %vm1599 = vmor %vm1597, %vm1598
    %v1600 = vsel %vm1599, %v1592, %v1596
    %v1601 = vand.u32 2147483647, %v1574
    %vm1602 = vcmp.eq.f32.partialorder %v1601, 8.507059e+37
    %v1603 = vand.u32 %v1574, 2147483648
    %v1604 = vor.u32 1.1754944e-38, %v1603
    %v1605 = vsel %vm1602, %v1604, %v1600
    %v1606 = vmul.f32 1.0, %v1605
    %v1607 = vrcp.pop %v1575
    %v1608 = vmul.f32 %v1575, %v1607
    %v1609 = vsub.f32 1.0, %v1608
    %v1610 = vmul.f32 %v1607, %v1609
    %v1611 = vadd.f32 %v1607, %v1610
    %vm1612 = vweird.f32 %v1575
    %vm1613 = vweird.f32 %v1607
    %vm1614 = vmor %vm1612, %vm1613
    %v1615 = vsel %vm1614, %v1607, %v1611
    %v1616 = vand.u32 2147483647, %v1575
    %vm1617 = vcmp.eq.f32.partialorder %v1616, 8.507059e+37
    %v1618 = vand.u32 %v1575, 2147483648
    %v1619 = vor.u32 1.1754944e-38, %v1618
    %v1620 = vsel %vm1617, %v1619, %v1615
    %v1621 = vmul.f32 1.0, %v1620
    %v1622 = vrcp.pop %v1576
    %v1623 = vmul.f32 %v1576, %v1622
    %v1624 = vsub.f32 1.0, %v1623
    %v1625 = vmul.f32 %v1622, %v1624
    %v1626 = vadd.f32 %v1622, %v1625
    %vm1627 = vweird.f32 %v1576
    %vm1628 = vweird.f32 %v1622
    %vm1629 = vmor %vm1627, %vm1628
    %v1630 = vsel %vm1629, %v1622, %v1626
    %v1631 = vand.u32 2147483647, %v1576
    %vm1632 = vcmp.eq.f32.partialorder %v1631, 8.507059e+37
    %v1633 = vand.u32 %v1576, 2147483648
    %v1634 = vor.u32 1.1754944e-38, %v1633
    %v1635 = vsel %vm1632, %v1634, %v1630
    %v1636 = vmul.f32 1.0, %v1635
    %v1637 = vmul.f32 %v1636, 2.0
    %v1638 = vsub.f32 %v1637, 1.0
    %v1639 = vmul.f32 %v1606, %v1469
    %v1640 = vmul.f32 %v1591, %v1638
    %v1641 = vadd.f32 %v1639, %v1640
    %v1642 = vtanh.pop %v1641
    %v1643 = vmul.f32 %v1621, %v1642
    %v1644 = vld [vmem:[%s4] sm:$0xff]
    %v1645 = vld [vmem:[%s4 + $0x8] sm:$0xff]
    %v1646 = vld [vmem:[%s4 + $0x10] sm:$0xff]
    %v1647 = vld [vmem:[%s4 + $0x18] sm:$0xff]
    %v1648 = vld [vmem:[%s4 + $0x20] sm:$0xff]
    %v1649 = vld [vmem:[%s4 + $0x28] sm:$0xff]
    %v1650 = vld [vmem:[%s4 + $0x30] sm:$0xff]
    %v1651 = vld [vmem:[%s4 + $0x38] sm:$0xff]
    %v1652 = vld [vmem:[%s4 + $0x40] sm:$0xff]
    %v1653 = vld [vmem:[%s4 + $0x48] sm:$0xff]
    %v1654 = vld [vmem:[%s4 + $0x50] sm:$0xff]
    %v1655 = vld [vmem:[%s4 + $0x58] sm:$0xff]
    %v1656 = vld [vmem:[%s4 + $0x60] sm:$0xff]
    %v1657 = vld [vmem:[%s4 + $0x68] sm:$0xff]
    %v1658 = vld [vmem:[%s4 + $0x70] sm:$0xff]
    %v1659 = vld [vmem:[%s4 + $0x78] sm:$0xff]
    %v1660 = vld [vmem:[#allocation3] sm:$0x1]
    %v1662 = vperm.slane %v1660, 0
    %1664 = vmatpush.msra.mxu0 %v1659
    %1665 = vmatpush.msra.mxu0 %v1658
    %1666 = vmatpush.msra.mxu0 %v1657
    %1667 = vmatpush.msra.mxu0 %v1656
    %1668 = vmatpush.msra.mxu0 %v1655
    %1669 = vmatpush.msra.mxu0 %v1654
    %1670 = vmatpush.msra.mxu0 %v1653
    %1671 = vmatpush.msra.mxu0 %v1652
    %1672 = vmatpush.msra.mxu0 %v1651
    %1673 = vmatpush.msra.mxu0 %v1650
    %1674 = vmatpush.msra.mxu0 %v1649
    %1675 = vmatpush.msra.mxu0 %v1648
    %1676 = vmatpush.msra.mxu0 %v1647
    %1677 = vmatpush.msra.mxu0 %v1646
    %1678 = vmatpush.msra.mxu0 %v1645
    %1679 = vmatpush.msra.mxu0 %v1644
    %1680 = vmatmul.f32.gmra.mxu0 %v1643
    %v1681 = vpop.f32.mrf.mxu0
    %v1682 = vadd.f32 %v1662, %v1681
    %1683 = vdwg.mxu0
    %vm1684 = vcmask 7168
    %1685 = vst.msk [vmem:[%s6] sm:$0xff] %vm1684, %v1682
    // Predicated region
    $region30: #{tpu_custom_call.1} parent=1 // pred_check
      _
    $region31: #{tpu_custom_call.1} parent=1 // pred_check_branch
      %1687 = sbr.rel (0) target = $region33
    $region32: #{tpu_custom_call.1} parent=1 // pred_region
      _
    $region33: #{tpu_custom_call.1} parent=1 // pred_fallthru
      _
    // Predicated region
    $region34: #{tpu_custom_call.1} parent=1 // pred_check
      _
    $region35: #{tpu_custom_call.1} parent=1 // pred_check_branch
      %1689 = sbr.rel (0) target = $region37
    $region36: #{tpu_custom_call.1} parent=1 // pred_region
      _
    $region37: #{tpu_custom_call.1} parent=1 // pred_fallthru
      _
    %1690 = vsyncpa [#allocation5], 1

</llo_original>
